<compile_context>
chip_gen: v6e
topology: v6e:2x2x1
jax: 0.10.0
libtpu: 0.0.40
codegen_flags: <defaults>
</compile_context>

<pallas_src>
import functools

import numpy as np

import jax
import jax.numpy as jnp
from jax import lax
from jax.experimental import pallas as pl
from jax.experimental.pallas import tpu as pltpu

LANE = 128  # channel padding width (TPU lane count)


# ----------------------------- fused Pallas kernel -----------------------------

def _decoder2_kernel(x_ref, *refs, L, R, c_out, very_bottom):
    """Whole Decoder2 forward for one batch element, activations resident in VMEM.

    x_ref : (1, L, LANE) input tile (channels zero-padded to LANE lanes).
    refs  : conv_in (W, b), R x (W1, b1, W2, b2), conv_mid even/odd (We, Wo, b),
            conv_out channel-major (Wt, b_col), placement mats (Qe, Qo),
            o_ref (1, c_out, 4L) NCL output, scratch a_ref / h_ref (L+2, LANE).
    """
    i = 0
    w_in, b_in = refs[i], refs[i + 1]; i += 2
    rb = []
    for _ in range(R):
        rb.append(refs[i:i + 4]); i += 4
    w_me, w_mo, b_m = refs[i], refs[i + 1], refs[i + 2]; i += 3
    w_ot, b_o = refs[i], refs[i + 1]; i += 2
    q_e, q_o = refs[i], refs[i + 1]; i += 2
    o_ref = refs[i]; i += 1
    a_ref, h_ref = refs[i], refs[i + 1]

    def mish(v):
        # mish(v) = v * tanh(softplus(v)).  Single-exp form: with s = 1 + e^v,
        # tanh(log(s)) = (s^2 - 1) / (s^2 + 1).  Clamp keeps s^2 finite in f32;
        # for v > 20 the gate is already 1.0 to f32 precision.
        e = jnp.exp(jnp.minimum(v, 20.0))
        s = 1.0 + e
        s2 = s * s
        return v * (s2 - 1.0) / (s2 + 1.0)

    def im2col3(p_ref):
        # (L, 3*LANE) im2col of a zero-halo (L+2, LANE) activation buffer.
        return jnp.concatenate(
            [p_ref[0:L, :], p_ref[1:L + 1, :], p_ref[2:L + 2, :]], axis=1)

    def conv3(p_ref, w_ref, b_ref):
        # Conv1d(k=3, pad=1) as ONE im2col matmul on the MXU (f32 accumulate).
        return jnp.dot(im2col3(p_ref), w_ref[...],
                       preferred_element_type=jnp.float32) + b_ref[...]

    # -- init VMEM-resident activation buffers: zero halo rows + zero pad lanes.
    a_ref[...] = jnp.zeros_like(a_ref)
    h_ref[...] = jnp.zeros_like(h_ref)
    a_ref[1:L + 1, :] = x_ref[0]

    # -- Conv1d(in_feat, hidden) + Mish
    a_ref[1:L + 1, :] = mish(conv3(a_ref, w_in, b_in))

    # -- ResBlocks: mish(conv1) -> conv2 + residual -> mish  (all in VMEM)
    for w1, b1, w2, b2 in rb:
        h_ref[1:L + 1, :] = mish(conv3(a_ref, w1, b1))
        res = a_ref[1:L + 1, :]
        a_ref[1:L + 1, :] = mish(conv3(h_ref, w2, b2) + res)

    # -- Upsample(x2 nearest) folded into Conv1d(hidden, hidden//2) + Mish:
    #      y[2i]   = w0 . a[i-1] + (w1+w2) . a[i]
    #      y[2i+1] = (w0+w1) . a[i] + w2 . a[i+1]
    #    (even/odd half-rate streams -> half the matmul M dim, no 2L tensor in HBM)
    row_m1 = a_ref[0:L, :]
    row_0 = a_ref[1:L + 1, :]
    row_p1 = a_ref[2:L + 2, :]
    ye = mish(jnp.dot(jnp.concatenate([row_m1, row_0], axis=1), w_me[...],
                      preferred_element_type=jnp.float32) + b_m[...])
    yo = mish(jnp.dot(jnp.concatenate([row_0, row_p1], axis=1), w_mo[...],
                      preferred_element_type=jnp.float32) + b_m[...])
    h_ref[1:L + 1, :] = ye          # even stream (zero halos preserved)
    a_ref[1:L + 1, :] = yo          # odd stream  (a_ref no longer needed)

    # -- Conv1d(hidden//2, out_feat) on the interleaved stream, computed in
    #    channel-major orientation so the kernel can store NCL directly:
    #      t_even[i] = v0.yo[i-1] + v1.ye[i] + v2.yo[i]
    #      t_odd[i]  = v0.ye[i]   + v1.yo[i] + v2.ye[i+1]
    im_e = jnp.concatenate(
        [a_ref[0:L, :], h_ref[1:L + 1, :], a_ref[1:L + 1, :]], axis=1)
    im_o = jnp.concatenate(
        [h_ref[1:L + 1, :], a_ref[1:L + 1, :], h_ref[2:L + 2, :]], axis=1)
    nt = (((1,), (1,)), ((), ()))                     # contract channel (lane) dims
    te = lax.dot_general(w_ot[...], im_e, nt, preferred_element_type=jnp.float32)
    to = lax.dot_general(w_ot[...], im_o, nt, preferred_element_type=jnp.float32)

    # -- Final Upsample(x2 nearest) + interleave + NCL layout folded into two
    #    constant 0/1 placement matmuls (exact: one nonzero per output column).
    out = (jnp.dot(te, q_e[...], preferred_element_type=jnp.float32)
           + jnp.dot(to, q_o[...], preferred_element_type=jnp.float32)
           + b_o[...])                                # (LANE, 4L), rows = channels
    if very_bottom:
        out = jnp.tanh(out)
    o_ref[0] = out[0:c_out, :].astype(o_ref.dtype)


# ------------------------------ weight packing ------------------------------

def _pack_conv3(w_kic, b, cp):
    """(3, Cin, Cout) taps + (Cout,) bias -> zero-padded im2col weights.

    Returns W (3*cp, cp) with W[k*cp + ci, co] = w[k, ci, co], and bias (1, cp).
    """
    _, cin, cout = w_kic.shape
    w = jnp.zeros((3 * cp, cp), jnp.float32)
    for k in range(3):
        w = w.at[k * cp:k * cp + cin, :cout].set(w_kic[k])
    bp = jnp.zeros((1, cp), jnp.float32).at[0, :cout].set(b)
    return w, bp


def _pack_mid_upsampled(w_kic, b, cp):
    """Fold the nearest x2 upsample into the conv taps (even/odd output streams)."""
    _, cin, cout = w_kic.shape
    w0, w1, w2 = w_kic[0], w_kic[1], w_kic[2]
    we = (jnp.zeros((2 * cp, cp), jnp.float32)
          .at[:cin, :cout].set(w0)
          .at[cp:cp + cin, :cout].set(w1 + w2))
    wo = (jnp.zeros((2 * cp, cp), jnp.float32)
          .at[:cin, :cout].set(w0 + w1)
          .at[cp:cp + cin, :cout].set(w2))
    bp = jnp.zeros((1, cp), jnp.float32).at[0, :cout].set(b)
    return we, wo, bp


def _pack_out_transposed(w_kic, b, cp):
    """Channel-major (NCL-producing) im2col weights for the last conv."""
    _, cin, cout = w_kic.shape
    wt = jnp.zeros((cp, 3 * cp), jnp.float32)
    for k in range(3):
        wt = wt.at[:cout, k * cp:k * cp + cin].set(w_kic[k].T)
    bcol = jnp.zeros((cp, 1), jnp.float32).at[:cout, 0].set(b)
    return wt, bcol


def _placement_mats(L):
    """0/1 matrices scattering the even/odd conv_out streams into final NCL
    positions: out[:, 4i+{0,1}] = t_even[i], out[:, 4i+{2,3}] = t_odd[i]
    (i.e. the trailing Upsample(x2) + interleave)."""
    qe = np.zeros((L, 4 * L), np.float32)
    qo = np.zeros((L, 4 * L), np.float32)
    for i in range(L):
        qe[i, 4 * i] = qe[i, 4 * i + 1] = 1.0
        qo[i, 4 * i + 2] = qo[i, 4 * i + 3] = 1.0
    return jnp.asarray(qe), jnp.asarray(qo)


# ------------------------------- forward pass -------------------------------

def decoder2_forward(x_ncl, params, *, num_res_blocks, very_bottom):
    """Decoder2.forward.  Input (N, C, L) and output (N, C_out, 4L) in PyTorch NCL."""
    N, Cin, L = x_ncl.shape
    hidden = params["w_in"].shape[2]
    c_out = params["w_out"].shape[2]
    cp = LANE
    assert max(Cin, hidden, hidden // 2, c_out) <= cp, "channel dims must fit one lane tile"

    # One-time layout prep (tiny vs. the per-layer HBM traffic the fusion removes):
    # NCL -> NLC and zero-pad the channels to the 128-lane tile once.
    x = jnp.transpose(x_ncl.astype(jnp.float32), (0, 2, 1))
    x = jnp.pad(x, ((0, 0), (0, 0), (0, cp - Cin)))

    w_in, b_in = _pack_conv3(params["w_in"], params["b_in"], cp)
    rb_packed = []
    for i in range(num_res_blocks):
        rb_packed += list(_pack_conv3(params[f"rb{i}_w1"], params[f"rb{i}_b1"], cp))
        rb_packed += list(_pack_conv3(params[f"rb{i}_w2"], params[f"rb{i}_b2"], cp))
    w_me, w_mo, b_m = _pack_mid_upsampled(params["w_mid"], params["b_mid"], cp)
    w_ot, b_o = _pack_out_transposed(params["w_out"], params["b_out"], cp)
    q_e, q_o = _placement_mats(L)

    args = [x, w_in, b_in, *rb_packed, w_me, w_mo, b_m, w_ot, b_o, q_e, q_o]
    in_specs = [pl.BlockSpec((1, L, cp), lambda n: (n, 0, 0))]
    in_specs += [pl.BlockSpec(a.shape, lambda n: (0, 0)) for a in args[1:]]  # all 2-D

    kern = functools.partial(_decoder2_kernel, L=L, R=num_res_blocks,
                             c_out=c_out, very_bottom=very_bottom)

    return pl.pallas_call(
        kern,
        out_shape=jax.ShapeDtypeStruct((N, c_out, 4 * L), jnp.float32),
        grid=(N,),
        in_specs=in_specs,
        out_specs=pl.BlockSpec((1, c_out, 4 * L), lambda n: (n, 0, 0)),
        scratch_shapes=[pltpu.VMEM((L + 2, cp), jnp.float32),
                        pltpu.VMEM((L + 2, cp), jnp.float32)],
        compiler_params=pltpu.CompilerParams(
            dimension_semantics=("parallel",)),
    )(*args)


# --------------------------- parameters (synthetic) ---------------------------

def _init_conv(key, cin, cout):
    """Deterministic init mimicking PyTorch Conv1d default (uniform, fan_in=3*cin)."""
    kw, kb = jax.random.split(key)
    bound = 1.0 / (3.0 * cin) ** 0.5
    w = jax.random.uniform(kw, (3, cin, cout), jnp.float32, -bound, bound)
    b = jax.random.uniform(kb, (cout,), jnp.float32, -bound, bound)
    return w, b


def init_decoder2_params(key, in_feat_dim, out_feat_dim, hidden_dim, num_res_blocks):
    keys = jax.random.split(key, 3 + 2 * num_res_blocks)
    p = {}
    p["w_in"], p["b_in"] = _init_conv(keys[0], in_feat_dim, hidden_dim)
    for i in range(num_res_blocks):
        p[f"rb{i}_w1"], p[f"rb{i}_b1"] = _init_conv(keys[1 + 2 * i], hidden_dim, hidden_dim // 2)
        p[f"rb{i}_w2"], p[f"rb{i}_b2"] = _init_conv(keys[2 + 2 * i], hidden_dim // 2, hidden_dim)
    p["w_mid"], p["b_mid"] = _init_conv(keys[-2], hidden_dim, hidden_dim // 2)
    p["w_out"], p["b_out"] = _init_conv(keys[-1], hidden_dim // 2, out_feat_dim)
    return p


# ------------------------------ pure-JAX reference ------------------------------

def _mish_ref(v):
    return v * jnp.tanh(jax.nn.softplus(v))


def _conv_ref(x_ncl, w_kic, b):
    w_oik = jnp.transpose(w_kic, (2, 1, 0))                      # (Cout, Cin, 3)
    y = lax.conv_general_dilated(
        x_ncl, w_oik, window_strides=(1,), padding=((1, 1),),
        dimension_numbers=("NCH", "OIH", "NCH"))
    return y + b[None, :, None]


def decoder2_reference(x_ncl, params, *, num_res_blocks, very_bottom):
    x = x_ncl.astype(jnp.float32)
    x = _mish_ref(_conv_ref(x, params["w_in"], params["b_in"]))
    for i in range(num_res_blocks):
        h = _mish_ref(_conv_ref(x, params[f"rb{i}_w1"], params[f"rb{i}_b1"]))
        h = _conv_ref(h, params[f"rb{i}_w2"], params[f"rb{i}_b2"])
        x = _mish_ref(h + x)
    x = jnp.repeat(x, 2, axis=2)
    x = _mish_ref(_conv_ref(x, params["w_mid"], params["b_mid"]))
    x = _conv_ref(x, params["w_out"], params["b_out"])
    x = jnp.repeat(x, 2, axis=2)
    if very_bottom:
        x = jnp.tanh(x)
    return x


# ----------------------------------- main -----------------------------------

if __name__ == "__main__":
    N, in_feat_dim, L = 2, 8, 16
    hidden_dim, out_feat_dim = 32, 4
    num_res_blocks = 1
    very_bottom = False

    key = jax.random.PRNGKey(0)
    k_x, k_p = jax.random.split(key)

    x = jax.random.normal(k_x, (N, in_feat_dim, L), jnp.float32)   # NCL, like PyTorch
    params = init_decoder2_params(k_p, in_feat_dim, out_feat_dim, hidden_dim,
                                  num_res_blocks)

    fwd = jax.jit(functools.partial(decoder2_forward,
                                    num_res_blocks=num_res_blocks,
                                    very_bottom=very_bottom))
    y = fwd(x, params)
    y = jax.block_until_ready(y)
    assert y.shape == (N, out_feat_dim, 4 * L), y.shape

    y_ref = decoder2_reference(x, params, num_res_blocks=num_res_blocks,
                               very_bottom=very_bottom)
    max_err = float(jnp.max(jnp.abs(y - y_ref)))
    assert max_err < 1e-2, f"mismatch vs reference, max abs err {max_err}"

    print("KERNEL_OK")
</pallas_src>

<mosaic_0001>
module attributes {stable_mosaic.version = 11 : i64} {
  func.func @_decoder2_kernel(%arg0: i32, %arg1: memref<1x16x128xf32, #tpu.memory_space<vmem>>, %arg2: memref<384x128xf32, #tpu.memory_space<vmem>>, %arg3: memref<1x128xf32, #tpu.memory_space<vmem>>, %arg4: memref<384x128xf32, #tpu.memory_space<vmem>>, %arg5: memref<1x128xf32, #tpu.memory_space<vmem>>, %arg6: memref<384x128xf32, #tpu.memory_space<vmem>>, %arg7: memref<1x128xf32, #tpu.memory_space<vmem>>, %arg8: memref<256x128xf32, #tpu.memory_space<vmem>>, %arg9: memref<256x128xf32, #tpu.memory_space<vmem>>, %arg10: memref<1x128xf32, #tpu.memory_space<vmem>>, %arg11: memref<128x384xf32, #tpu.memory_space<vmem>>, %arg12: memref<128x1xf32, #tpu.memory_space<vmem>>, %arg13: memref<16x64xf32, #tpu.memory_space<vmem>>, %arg14: memref<16x64xf32, #tpu.memory_space<vmem>>, %arg15: memref<1x4x64xf32, #tpu.memory_space<vmem>>, %arg16: memref<18x128xf32, #tpu.memory_space<vmem>>, %arg17: memref<18x128xf32, #tpu.memory_space<vmem>>) attributes {dimension_semantics = [#tpu.dimension_semantics<parallel>], iteration_bounds = array<i64: 2>, scalar_prefetch = 0 : i64, scratch_operands = 2 : i64, tpu.core_type = #tpu.core_type<tc>, window_params = [{transform_indices = @transform_0, window_bounds = array<i64: 1, 16, 128>}, {pipeline_mode = #tpu.pipeline_mode<synchronous>, transform_indices = @transform_1, window_bounds = array<i64: 384, 128>}, {pipeline_mode = #tpu.pipeline_mode<synchronous>, transform_indices = @transform_2, window_bounds = array<i64: 1, 128>}, {pipeline_mode = #tpu.pipeline_mode<synchronous>, transform_indices = @transform_3, window_bounds = array<i64: 384, 128>}, {pipeline_mode = #tpu.pipeline_mode<synchronous>, transform_indices = @transform_4, window_bounds = array<i64: 1, 128>}, {pipeline_mode = #tpu.pipeline_mode<synchronous>, transform_indices = @transform_5, window_bounds = array<i64: 384, 128>}, {pipeline_mode = #tpu.pipeline_mode<synchronous>, transform_indices = @transform_6, window_bounds = array<i64: 1, 128>}, {pipeline_mode = #tpu.pipeline_mode<synchronous>, transform_indices = @transform_7, window_bounds = array<i64: 256, 128>}, {pipeline_mode = #tpu.pipeline_mode<synchronous>, transform_indices = @transform_8, window_bounds = array<i64: 256, 128>}, {pipeline_mode = #tpu.pipeline_mode<synchronous>, transform_indices = @transform_9, window_bounds = array<i64: 1, 128>}, {pipeline_mode = #tpu.pipeline_mode<synchronous>, transform_indices = @transform_10, window_bounds = array<i64: 128, 384>}, {pipeline_mode = #tpu.pipeline_mode<synchronous>, transform_indices = @transform_11, window_bounds = array<i64: 128, 1>}, {pipeline_mode = #tpu.pipeline_mode<synchronous>, transform_indices = @transform_12, window_bounds = array<i64: 16, 64>}, {pipeline_mode = #tpu.pipeline_mode<synchronous>, transform_indices = @transform_13, window_bounds = array<i64: 16, 64>}, {transform_indices = @transform_14, window_bounds = array<i64: 1, 4, 64>}]} {
    %cst = arith.constant 0.000000e+00 : f32
    %0 = vector.broadcast %cst : f32 to vector<18x128xf32>
    %c0 = arith.constant 0 : index
    %c0_0 = arith.constant 0 : index
    %1 = vector.load %arg16[%c0, %c0_0] : memref<18x128xf32, #tpu.memory_space<vmem>>, vector<18x128xf32>
    tpu.vector_store %arg16[%c0, %c0_0], %0 {strides = array<i32>} : memref<18x128xf32, #tpu.memory_space<vmem>>, vector<18x128xf32>,
    %cst_1 = arith.constant 0.000000e+00 : f32
    %2 = vector.broadcast %cst_1 : f32 to vector<18x128xf32>
    %c0_2 = arith.constant 0 : index
    %c0_3 = arith.constant 0 : index
    %3 = vector.load %arg17[%c0_2, %c0_3] : memref<18x128xf32, #tpu.memory_space<vmem>>, vector<18x128xf32>
    tpu.vector_store %arg17[%c0_2, %c0_3], %2 {strides = array<i32>} : memref<18x128xf32, #tpu.memory_space<vmem>>, vector<18x128xf32>,
    %c0_4 = arith.constant 0 : index
    %c0_5 = arith.constant 0 : index
    %c0_6 = arith.constant 0 : index
    %4 = vector.load %arg1[%c0_4, %c0_5, %c0_6] : memref<1x16x128xf32, #tpu.memory_space<vmem>>, vector<1x16x128xf32>
    %5 = vector.shape_cast %4 : vector<1x16x128xf32> to vector<16x128xf32>
    %c1 = arith.constant 1 : index
    %c0_7 = arith.constant 0 : index
    %6 = vector.load %arg16[%c1, %c0_7] : memref<18x128xf32, #tpu.memory_space<vmem>>, vector<16x128xf32>
    tpu.vector_store %arg16[%c1, %c0_7], %5 {strides = array<i32>} : memref<18x128xf32, #tpu.memory_space<vmem>>, vector<16x128xf32>,
    %c0_8 = arith.constant 0 : index
    %c0_9 = arith.constant 0 : index
    %7 = vector.load %arg16[%c0_8, %c0_9] : memref<18x128xf32, #tpu.memory_space<vmem>>, vector<16x128xf32>
    %c1_10 = arith.constant 1 : index
    %c0_11 = arith.constant 0 : index
    %8 = vector.load %arg16[%c1_10, %c0_11] : memref<18x128xf32, #tpu.memory_space<vmem>>, vector<16x128xf32>
    %c2 = arith.constant 2 : index
    %c0_12 = arith.constant 0 : index
    %9 = vector.load %arg16[%c2, %c0_12] : memref<18x128xf32, #tpu.memory_space<vmem>>, vector<16x128xf32>
    %10 = tpu.concatenate %7, %8, %9 in 1 : vector<16x128xf32>, vector<16x128xf32>, vector<16x128xf32> -> vector<16x384xf32>
    %c0_13 = arith.constant 0 : index
    %c0_14 = arith.constant 0 : index
    %11 = vector.load %arg2[%c0_13, %c0_14] : memref<384x128xf32, #tpu.memory_space<vmem>>, vector<384x128xf32>
    %cst_15 = arith.constant dense<0.000000e+00> : vector<16x128xf32>
    %12 = tpu.matmul %10, %11, %cst_15 {dimension_numbers = #tpu.dot_dimension_numbers<[1], [0], [0], [1], [0, 0, 1, 1], [], []>} : vector<16x384xf32>, vector<384x128xf32>, vector<16x128xf32> -> vector<16x128xf32>
    %c0_16 = arith.constant 0 : index
    %c0_17 = arith.constant 0 : index
    %13 = vector.load %arg3[%c0_16, %c0_17] : memref<1x128xf32, #tpu.memory_space<vmem>>, vector<1x128xf32>
    %14 = vector.broadcast %13 : vector<1x128xf32> to vector<16x128xf32>
    %15 = arith.addf %12, %14 : vector<16x128xf32>
    %cst_18 = arith.constant 2.000000e+01 : f32
    %16 = vector.broadcast %cst_18 : f32 to vector<16x128xf32>
    %17 = arith.minimumf %15, %16 : vector<16x128xf32>
    %18 = math.exp %17 : vector<16x128xf32>
    %cst_19 = arith.constant 1.000000e+00 : f32
    %19 = vector.broadcast %cst_19 : f32 to vector<16x128xf32>
    %20 = arith.addf %19, %18 : vector<16x128xf32>
    %21 = arith.mulf %20, %20 : vector<16x128xf32>
    %cst_20 = arith.constant 1.000000e+00 : f32
    %22 = vector.broadcast %cst_20 : f32 to vector<16x128xf32>
    %23 = arith.subf %21, %22 : vector<16x128xf32>
    %24 = arith.mulf %15, %23 : vector<16x128xf32>
    %cst_21 = arith.constant 1.000000e+00 : f32
    %25 = vector.broadcast %cst_21 : f32 to vector<16x128xf32>
    %26 = arith.addf %21, %25 : vector<16x128xf32>
    %27 = arith.divf %24, %26 : vector<16x128xf32>
    %c1_22 = arith.constant 1 : index
    %c0_23 = arith.constant 0 : index
    %28 = vector.load %arg16[%c1_22, %c0_23] : memref<18x128xf32, #tpu.memory_space<vmem>>, vector<16x128xf32>
    tpu.vector_store %arg16[%c1_22, %c0_23], %27 {strides = array<i32>} : memref<18x128xf32, #tpu.memory_space<vmem>>, vector<16x128xf32>,
    %c0_24 = arith.constant 0 : index
    %c0_25 = arith.constant 0 : index
    %29 = vector.load %arg16[%c0_24, %c0_25] : memref<18x128xf32, #tpu.memory_space<vmem>>, vector<16x128xf32>
    %c1_26 = arith.constant 1 : index
    %c0_27 = arith.constant 0 : index
    %30 = vector.load %arg16[%c1_26, %c0_27] : memref<18x128xf32, #tpu.memory_space<vmem>>, vector<16x128xf32>
    %c2_28 = arith.constant 2 : index
    %c0_29 = arith.constant 0 : index
    %31 = vector.load %arg16[%c2_28, %c0_29] : memref<18x128xf32, #tpu.memory_space<vmem>>, vector<16x128xf32>
    %32 = tpu.concatenate %29, %30, %31 in 1 : vector<16x128xf32>, vector<16x128xf32>, vector<16x128xf32> -> vector<16x384xf32>
    %c0_30 = arith.constant 0 : index
    %c0_31 = arith.constant 0 : index
    %33 = vector.load %arg4[%c0_30, %c0_31] : memref<384x128xf32, #tpu.memory_space<vmem>>, vector<384x128xf32>
    %cst_32 = arith.constant dense<0.000000e+00> : vector<16x128xf32>
    %34 = tpu.matmul %32, %33, %cst_32 {dimension_numbers = #tpu.dot_dimension_numbers<[1], [0], [0], [1], [0, 0, 1, 1], [], []>} : vector<16x384xf32>, vector<384x128xf32>, vector<16x128xf32> -> vector<16x128xf32>
    %c0_33 = arith.constant 0 : index
    %c0_34 = arith.constant 0 : index
    %35 = vector.load %arg5[%c0_33, %c0_34] : memref<1x128xf32, #tpu.memory_space<vmem>>, vector<1x128xf32>
    %36 = vector.broadcast %35 : vector<1x128xf32> to vector<16x128xf32>
    %37 = arith.addf %34, %36 : vector<16x128xf32>
    %cst_35 = arith.constant 2.000000e+01 : f32
    %38 = vector.broadcast %cst_35 : f32 to vector<16x128xf32>
    %39 = arith.minimumf %37, %38 : vector<16x128xf32>
    %40 = math.exp %39 : vector<16x128xf32>
    %cst_36 = arith.constant 1.000000e+00 : f32
    %41 = vector.broadcast %cst_36 : f32 to vector<16x128xf32>
    %42 = arith.addf %41, %40 : vector<16x128xf32>
    %43 = arith.mulf %42, %42 : vector<16x128xf32>
    %cst_37 = arith.constant 1.000000e+00 : f32
    %44 = vector.broadcast %cst_37 : f32 to vector<16x128xf32>
    %45 = arith.subf %43, %44 : vector<16x128xf32>
    %46 = arith.mulf %37, %45 : vector<16x128xf32>
    %cst_38 = arith.constant 1.000000e+00 : f32
    %47 = vector.broadcast %cst_38 : f32 to vector<16x128xf32>
    %48 = arith.addf %43, %47 : vector<16x128xf32>
    %49 = arith.divf %46, %48 : vector<16x128xf32>
    %c1_39 = arith.constant 1 : index
    %c0_40 = arith.constant 0 : index
    %50 = vector.load %arg17[%c1_39, %c0_40] : memref<18x128xf32, #tpu.memory_space<vmem>>, vector<16x128xf32>
    tpu.vector_store %arg17[%c1_39, %c0_40], %49 {strides = array<i32>} : memref<18x128xf32, #tpu.memory_space<vmem>>, vector<16x128xf32>,
    %c1_41 = arith.constant 1 : index
    %c0_42 = arith.constant 0 : index
    %51 = vector.load %arg16[%c1_41, %c0_42] : memref<18x128xf32, #tpu.memory_space<vmem>>, vector<16x128xf32>
    %c0_43 = arith.constant 0 : index
    %c0_44 = arith.constant 0 : index
    %52 = vector.load %arg17[%c0_43, %c0_44] : memref<18x128xf32, #tpu.memory_space<vmem>>, vector<16x128xf32>
    %c1_45 = arith.constant 1 : index
    %c0_46 = arith.constant 0 : index
    %53 = vector.load %arg17[%c1_45, %c0_46] : memref<18x128xf32, #tpu.memory_space<vmem>>, vector<16x128xf32>
    %c2_47 = arith.constant 2 : index
    %c0_48 = arith.constant 0 : index
    %54 = vector.load %arg17[%c2_47, %c0_48] : memref<18x128xf32, #tpu.memory_space<vmem>>, vector<16x128xf32>
    %55 = tpu.concatenate %52, %53, %54 in 1 : vector<16x128xf32>, vector<16x128xf32>, vector<16x128xf32> -> vector<16x384xf32>
    %c0_49 = arith.constant 0 : index
    %c0_50 = arith.constant 0 : index
    %56 = vector.load %arg6[%c0_49, %c0_50] : memref<384x128xf32, #tpu.memory_space<vmem>>, vector<384x128xf32>
    %cst_51 = arith.constant dense<0.000000e+00> : vector<16x128xf32>
    %57 = tpu.matmul %55, %56, %cst_51 {dimension_numbers = #tpu.dot_dimension_numbers<[1], [0], [0], [1], [0, 0, 1, 1], [], []>} : vector<16x384xf32>, vector<384x128xf32>, vector<16x128xf32> -> vector<16x128xf32>
    %c0_52 = arith.constant 0 : index
    %c0_53 = arith.constant 0 : index
    %58 = vector.load %arg7[%c0_52, %c0_53] : memref<1x128xf32, #tpu.memory_space<vmem>>, vector<1x128xf32>
    %59 = vector.broadcast %58 : vector<1x128xf32> to vector<16x128xf32>
    %60 = arith.addf %57, %59 : vector<16x128xf32>
    %61 = arith.addf %60, %51 : vector<16x128xf32>
    %cst_54 = arith.constant 2.000000e+01 : f32
    %62 = vector.broadcast %cst_54 : f32 to vector<16x128xf32>
    %63 = arith.minimumf %61, %62 : vector<16x128xf32>
    %64 = math.exp %63 : vector<16x128xf32>
    %cst_55 = arith.constant 1.000000e+00 : f32
    %65 = vector.broadcast %cst_55 : f32 to vector<16x128xf32>
    %66 = arith.addf %65, %64 : vector<16x128xf32>
    %67 = arith.mulf %66, %66 : vector<16x128xf32>
    %cst_56 = arith.constant 1.000000e+00 : f32
    %68 = vector.broadcast %cst_56 : f32 to vector<16x128xf32>
    %69 = arith.subf %67, %68 : vector<16x128xf32>
    %70 = arith.mulf %61, %69 : vector<16x128xf32>
    %cst_57 = arith.constant 1.000000e+00 : f32
    %71 = vector.broadcast %cst_57 : f32 to vector<16x128xf32>
    %72 = arith.addf %67, %71 : vector<16x128xf32>
    %73 = arith.divf %70, %72 : vector<16x128xf32>
    %c1_58 = arith.constant 1 : index
    %c0_59 = arith.constant 0 : index
    %74 = vector.load %arg16[%c1_58, %c0_59] : memref<18x128xf32, #tpu.memory_space<vmem>>, vector<16x128xf32>
    tpu.vector_store %arg16[%c1_58, %c0_59], %73 {strides = array<i32>} : memref<18x128xf32, #tpu.memory_space<vmem>>, vector<16x128xf32>,
    %c0_60 = arith.constant 0 : index
    %c0_61 = arith.constant 0 : index
    %75 = vector.load %arg16[%c0_60, %c0_61] : memref<18x128xf32, #tpu.memory_space<vmem>>, vector<16x128xf32>
    %c1_62 = arith.constant 1 : index
    %c0_63 = arith.constant 0 : index
    %76 = vector.load %arg16[%c1_62, %c0_63] : memref<18x128xf32, #tpu.memory_space<vmem>>, vector<16x128xf32>
    %c2_64 = arith.constant 2 : index
    %c0_65 = arith.constant 0 : index
    %77 = vector.load %arg16[%c2_64, %c0_65] : memref<18x128xf32, #tpu.memory_space<vmem>>, vector<16x128xf32>
    %78 = tpu.concatenate %75, %76 in 1 : vector<16x128xf32>, vector<16x128xf32> -> vector<16x256xf32>
    %c0_66 = arith.constant 0 : index
    %c0_67 = arith.constant 0 : index
    %79 = vector.load %arg8[%c0_66, %c0_67] : memref<256x128xf32, #tpu.memory_space<vmem>>, vector<256x128xf32>
    %cst_68 = arith.constant dense<0.000000e+00> : vector<16x128xf32>
    %80 = tpu.matmul %78, %79, %cst_68 {dimension_numbers = #tpu.dot_dimension_numbers<[1], [0], [0], [1], [0, 0, 1, 1], [], []>} : vector<16x256xf32>, vector<256x128xf32>, vector<16x128xf32> -> vector<16x128xf32>
    %c0_69 = arith.constant 0 : index
    %c0_70 = arith.constant 0 : index
    %81 = vector.load %arg10[%c0_69, %c0_70] : memref<1x128xf32, #tpu.memory_space<vmem>>, vector<1x128xf32>
    %82 = vector.broadcast %81 : vector<1x128xf32> to vector<16x128xf32>
    %83 = arith.addf %80, %82 : vector<16x128xf32>
    %cst_71 = arith.constant 2.000000e+01 : f32
    %84 = vector.broadcast %cst_71 : f32 to vector<16x128xf32>
    %85 = arith.minimumf %83, %84 : vector<16x128xf32>
    %86 = math.exp %85 : vector<16x128xf32>
    %cst_72 = arith.constant 1.000000e+00 : f32
    %87 = vector.broadcast %cst_72 : f32 to vector<16x128xf32>
    %88 = arith.addf %87, %86 : vector<16x128xf32>
    %89 = arith.mulf %88, %88 : vector<16x128xf32>
    %cst_73 = arith.constant 1.000000e+00 : f32
    %90 = vector.broadcast %cst_73 : f32 to vector<16x128xf32>
    %91 = arith.subf %89, %90 : vector<16x128xf32>
    %92 = arith.mulf %83, %91 : vector<16x128xf32>
    %cst_74 = arith.constant 1.000000e+00 : f32
    %93 = vector.broadcast %cst_74 : f32 to vector<16x128xf32>
    %94 = arith.addf %89, %93 : vector<16x128xf32>
    %95 = arith.divf %92, %94 : vector<16x128xf32>
    %96 = tpu.concatenate %76, %77 in 1 : vector<16x128xf32>, vector<16x128xf32> -> vector<16x256xf32>
    %c0_75 = arith.constant 0 : index
    %c0_76 = arith.constant 0 : index
    %97 = vector.load %arg9[%c0_75, %c0_76] : memref<256x128xf32, #tpu.memory_space<vmem>>, vector<256x128xf32>
    %cst_77 = arith.constant dense<0.000000e+00> : vector<16x128xf32>
    %98 = tpu.matmul %96, %97, %cst_77 {dimension_numbers = #tpu.dot_dimension_numbers<[1], [0], [0], [1], [0, 0, 1, 1], [], []>} : vector<16x256xf32>, vector<256x128xf32>, vector<16x128xf32> -> vector<16x128xf32>
    %c0_78 = arith.constant 0 : index
    %c0_79 = arith.constant 0 : index
    %99 = vector.load %arg10[%c0_78, %c0_79] : memref<1x128xf32, #tpu.memory_space<vmem>>, vector<1x128xf32>
    %100 = vector.broadcast %99 : vector<1x128xf32> to vector<16x128xf32>
    %101 = arith.addf %98, %100 : vector<16x128xf32>
    %cst_80 = arith.constant 2.000000e+01 : f32
    %102 = vector.broadcast %cst_80 : f32 to vector<16x128xf32>
    %103 = arith.minimumf %101, %102 : vector<16x128xf32>
    %104 = math.exp %103 : vector<16x128xf32>
    %cst_81 = arith.constant 1.000000e+00 : f32
    %105 = vector.broadcast %cst_81 : f32 to vector<16x128xf32>
    %106 = arith.addf %105, %104 : vector<16x128xf32>
    %107 = arith.mulf %106, %106 : vector<16x128xf32>
    %cst_82 = arith.constant 1.000000e+00 : f32
    %108 = vector.broadcast %cst_82 : f32 to vector<16x128xf32>
    %109 = arith.subf %107, %108 : vector<16x128xf32>
    %110 = arith.mulf %101, %109 : vector<16x128xf32>
    %cst_83 = arith.constant 1.000000e+00 : f32
    %111 = vector.broadcast %cst_83 : f32 to vector<16x128xf32>
    %112 = arith.addf %107, %111 : vector<16x128xf32>
    %113 = arith.divf %110, %112 : vector<16x128xf32>
    %c1_84 = arith.constant 1 : index
    %c0_85 = arith.constant 0 : index
    %114 = vector.load %arg17[%c1_84, %c0_85] : memref<18x128xf32, #tpu.memory_space<vmem>>, vector<16x128xf32>
    tpu.vector_store %arg17[%c1_84, %c0_85], %95 {strides = array<i32>} : memref<18x128xf32, #tpu.memory_space<vmem>>, vector<16x128xf32>,
    %c1_86 = arith.constant 1 : index
    %c0_87 = arith.constant 0 : index
    %115 = vector.load %arg16[%c1_86, %c0_87] : memref<18x128xf32, #tpu.memory_space<vmem>>, vector<16x128xf32>
    tpu.vector_store %arg16[%c1_86, %c0_87], %113 {strides = array<i32>} : memref<18x128xf32, #tpu.memory_space<vmem>>, vector<16x128xf32>,
    %c0_88 = arith.constant 0 : index
    %c0_89 = arith.constant 0 : index
    %116 = vector.load %arg16[%c0_88, %c0_89] : memref<18x128xf32, #tpu.memory_space<vmem>>, vector<16x128xf32>
    %c1_90 = arith.constant 1 : index
    %c0_91 = arith.constant 0 : index
    %117 = vector.load %arg17[%c1_90, %c0_91] : memref<18x128xf32, #tpu.memory_space<vmem>>, vector<16x128xf32>
    %c1_92 = arith.constant 1 : index
    %c0_93 = arith.constant 0 : index
    %118 = vector.load %arg16[%c1_92, %c0_93] : memref<18x128xf32, #tpu.memory_space<vmem>>, vector<16x128xf32>
    %119 = tpu.concatenate %116, %117, %118 in 1 : vector<16x128xf32>, vector<16x128xf32>, vector<16x128xf32> -> vector<16x384xf32>
    %c1_94 = arith.constant 1 : index
    %c0_95 = arith.constant 0 : index
    %120 = vector.load %arg17[%c1_94, %c0_95] : memref<18x128xf32, #tpu.memory_space<vmem>>, vector<16x128xf32>
    %c1_96 = arith.constant 1 : index
    %c0_97 = arith.constant 0 : index
    %121 = vector.load %arg16[%c1_96, %c0_97] : memref<18x128xf32, #tpu.memory_space<vmem>>, vector<16x128xf32>
    %c2_98 = arith.constant 2 : index
    %c0_99 = arith.constant 0 : index
    %122 = vector.load %arg17[%c2_98, %c0_99] : memref<18x128xf32, #tpu.memory_space<vmem>>, vector<16x128xf32>
    %123 = tpu.concatenate %120, %121, %122 in 1 : vector<16x128xf32>, vector<16x128xf32>, vector<16x128xf32> -> vector<16x384xf32>
    %c0_100 = arith.constant 0 : index
    %c0_101 = arith.constant 0 : index
    %124 = vector.load %arg11[%c0_100, %c0_101] : memref<128x384xf32, #tpu.memory_space<vmem>>, vector<128x384xf32>
    %cst_102 = arith.constant dense<0.000000e+00> : vector<128x16xf32>
    %125 = tpu.matmul %124, %119, %cst_102 {dimension_numbers = #tpu.dot_dimension_numbers<[1], [1], [0], [0], [0, 0, 1, 0], [], []>} : vector<128x384xf32>, vector<16x384xf32>, vector<128x16xf32> -> vector<128x16xf32>
    %c0_103 = arith.constant 0 : index
    %c0_104 = arith.constant 0 : index
    %126 = vector.load %arg11[%c0_103, %c0_104] : memref<128x384xf32, #tpu.memory_space<vmem>>, vector<128x384xf32>
    %cst_105 = arith.constant dense<0.000000e+00> : vector<128x16xf32>
    %127 = tpu.matmul %126, %123, %cst_105 {dimension_numbers = #tpu.dot_dimension_numbers<[1], [1], [0], [0], [0, 0, 1, 0], [], []>} : vector<128x384xf32>, vector<16x384xf32>, vector<128x16xf32> -> vector<128x16xf32>
    %c0_106 = arith.constant 0 : index
    %c0_107 = arith.constant 0 : index
    %128 = vector.load %arg13[%c0_106, %c0_107] : memref<16x64xf32, #tpu.memory_space<vmem>>, vector<16x64xf32>
    %cst_108 = arith.constant dense<0.000000e+00> : vector<128x64xf32>
    %129 = tpu.matmul %125, %128, %cst_108 {dimension_numbers = #tpu.dot_dimension_numbers<[1], [0], [0], [1], [0, 0, 1, 1], [], []>} : vector<128x16xf32>, vector<16x64xf32>, vector<128x64xf32> -> vector<128x64xf32>
    %c0_109 = arith.constant 0 : index
    %c0_110 = arith.constant 0 : index
    %130 = vector.load %arg14[%c0_109, %c0_110] : memref<16x64xf32, #tpu.memory_space<vmem>>, vector<16x64xf32>
    %cst_111 = arith.constant dense<0.000000e+00> : vector<128x64xf32>
    %131 = tpu.matmul %127, %130, %cst_111 {dimension_numbers = #tpu.dot_dimension_numbers<[1], [0], [0], [1], [0, 0, 1, 1], [], []>} : vector<128x16xf32>, vector<16x64xf32>, vector<128x64xf32> -> vector<128x64xf32>
    %132 = arith.addf %129, %131 : vector<128x64xf32>
    %c0_112 = arith.constant 0 : index
    %c0_113 = arith.constant 0 : index
    %133 = vector.load %arg12[%c0_112, %c0_113] : memref<128x1xf32, #tpu.memory_space<vmem>>, vector<128x1xf32>
    %134 = vector.broadcast %133 : vector<128x1xf32> to vector<128x64xf32>
    %135 = arith.addf %132, %134 : vector<128x64xf32>
    %136 = vector.extract_strided_slice %135 {offsets = [0, 0], sizes = [4, 64], strides = [1, 1]} : vector<128x64xf32> to vector<4x64xf32>
    %c0_114 = arith.constant 0 : index
    %c0_115 = arith.constant 0 : index
    %c0_116 = arith.constant 0 : index
    %137 = vector.load %arg15[%c0_114, %c0_115, %c0_116] : memref<1x4x64xf32, #tpu.memory_space<vmem>>, vector<1x4x64xf32>
    %138 = vector.shape_cast %137 : vector<1x4x64xf32> to vector<4x64xf32>
    %139 = vector.shape_cast %136 : vector<4x64xf32> to vector<1x4x64xf32>
    tpu.vector_store %arg15[%c0_114, %c0_115, %c0_116], %139 {strides = array<i32>} : memref<1x4x64xf32, #tpu.memory_space<vmem>>, vector<1x4x64xf32>,
    return
  }
  func.func @transform_0(%arg0: i32) -> (i32, i32, i32) {
    %c0_i32 = arith.constant 0 : i32
    %c0_i32_0 = arith.constant 0 : i32
    %c0_i32_1 = arith.constant 0 : i32
    return %arg0, %c0_i32, %c0_i32_0 : i32, i32, i32
  }
  func.func @transform_1(%arg0: i32) -> (i32, i32) {
    %c0_i32 = arith.constant 0 : i32
    %c0_i32_0 = arith.constant 0 : i32
    %c0_i32_1 = arith.constant 0 : i32
    return %c0_i32, %c0_i32_0 : i32, i32
  }
  func.func @transform_2(%arg0: i32) -> (i32, i32) {
    %c0_i32 = arith.constant 0 : i32
    %c0_i32_0 = arith.constant 0 : i32
    %c0_i32_1 = arith.constant 0 : i32
    return %c0_i32, %c0_i32_0 : i32, i32
  }
  func.func @transform_3(%arg0: i32) -> (i32, i32) {
    %c0_i32 = arith.constant 0 : i32
    %c0_i32_0 = arith.constant 0 : i32
    %c0_i32_1 = arith.constant 0 : i32
    return %c0_i32, %c0_i32_0 : i32, i32
  }
  func.func @transform_4(%arg0: i32) -> (i32, i32) {
    %c0_i32 = arith.constant 0 : i32
    %c0_i32_0 = arith.constant 0 : i32
    %c0_i32_1 = arith.constant 0 : i32
    return %c0_i32, %c0_i32_0 : i32, i32
  }
  func.func @transform_5(%arg0: i32) -> (i32, i32) {
    %c0_i32 = arith.constant 0 : i32
    %c0_i32_0 = arith.constant 0 : i32
    %c0_i32_1 = arith.constant 0 : i32
    return %c0_i32, %c0_i32_0 : i32, i32
  }
  func.func @transform_6(%arg0: i32) -> (i32, i32) {
    %c0_i32 = arith.constant 0 : i32
    %c0_i32_0 = arith.constant 0 : i32
    %c0_i32_1 = arith.constant 0 : i32
    return %c0_i32, %c0_i32_0 : i32, i32
  }
  func.func @transform_7(%arg0: i32) -> (i32, i32) {
    %c0_i32 = arith.constant 0 : i32
    %c0_i32_0 = arith.constant 0 : i32
    %c0_i32_1 = arith.constant 0 : i32
    return %c0_i32, %c0_i32_0 : i32, i32
  }
  func.func @transform_8(%arg0: i32) -> (i32, i32) {
    %c0_i32 = arith.constant 0 : i32
    %c0_i32_0 = arith.constant 0 : i32
    %c0_i32_1 = arith.constant 0 : i32
    return %c0_i32, %c0_i32_0 : i32, i32
  }
  func.func @transform_9(%arg0: i32) -> (i32, i32) {
    %c0_i32 = arith.constant 0 : i32
    %c0_i32_0 = arith.constant 0 : i32
    %c0_i32_1 = arith.constant 0 : i32
    return %c0_i32, %c0_i32_0 : i32, i32
  }
  func.func @transform_10(%arg0: i32) -> (i32, i32) {
    %c0_i32 = arith.constant 0 : i32
    %c0_i32_0 = arith.constant 0 : i32
    %c0_i32_1 = arith.constant 0 : i32
    return %c0_i32, %c0_i32_0 : i32, i32
  }
  func.func @transform_11(%arg0: i32) -> (i32, i32) {
    %c0_i32 = arith.constant 0 : i32
    %c0_i32_0 = arith.constant 0 : i32
    %c0_i32_1 = arith.constant 0 : i32
    return %c0_i32, %c0_i32_0 : i32, i32
  }
  func.func @transform_12(%arg0: i32) -> (i32, i32) {
    %c0_i32 = arith.constant 0 : i32
    %c0_i32_0 = arith.constant 0 : i32
    %c0_i32_1 = arith.constant 0 : i32
    return %c0_i32, %c0_i32_0 : i32, i32
  }
  func.func @transform_13(%arg0: i32) -> (i32, i32) {
    %c0_i32 = arith.constant 0 : i32
    %c0_i32_0 = arith.constant 0 : i32
    %c0_i32_1 = arith.constant 0 : i32
    return %c0_i32, %c0_i32_0 : i32, i32
  }
  func.func @transform_14(%arg0: i32) -> (i32, i32, i32) {
    %c0_i32 = arith.constant 0 : i32
    %c0_i32_0 = arith.constant 0 : i32
    %c0_i32_1 = arith.constant 0 : i32
    return %arg0, %c0_i32, %c0_i32_0 : i32, i32, i32
  }
}

</mosaic_0001>

<llo_original>
// kernel: decoder2_forward.1
$region0: #{decoder2_forward.1}
  #allocation0 [shape = 'u32[]', space=smem, size = 0x4, offset = 0x4, fixed_abs, tag = 'smem constant byte address 0x4 - core index']
  #allocation1 [shape = 'u32[144,128]{1,0:T(1,128)}', space=vmem, size = 0x12000, scoped, tag = 'internal scratch']
  #allocation2 [shape = 'f32[18,128]{1,0:T(8,128)}', space=vmem, size = 0x3000, scoped, tag = 'scratch operand']
  #allocation3 [shape = 'f32[18,128]{1,0:T(8,128)}', space=vmem, size = 0x3000, scoped, tag = 'scratch operand']
  %s0 = inlined_call_operand.vmem [shape: f32[2,16,128], index: 0, kind: input, shape index: {}]
  %s1 = inlined_call_operand.vmem [shape: f32[384,128], index: 1, kind: input, shape index: {}]
  %s2 = inlined_call_operand.vmem [shape: f32[1,128], index: 2, kind: input, shape index: {}]
  %s3 = inlined_call_operand.vmem [shape: f32[384,128], index: 3, kind: input, shape index: {}]
  %s4 = inlined_call_operand.vmem [shape: f32[1,128], index: 4, kind: input, shape index: {}]
  %s5 = inlined_call_operand.vmem [shape: f32[384,128], index: 5, kind: input, shape index: {}]
  %s6 = inlined_call_operand.vmem [shape: f32[1,128], index: 6, kind: input, shape index: {}]
  %s7 = inlined_call_operand.vmem [shape: f32[256,128], index: 7, kind: input, shape index: {}]
  %s8 = inlined_call_operand.vmem [shape: f32[256,128], index: 8, kind: input, shape index: {}]
  %s9 = inlined_call_operand.vmem [shape: f32[1,128], index: 9, kind: input, shape index: {}]
  %s10 = inlined_call_operand.vmem [shape: f32[128,384], index: 10, kind: input, shape index: {}]
  %s11 = inlined_call_operand.vmem [shape: f32[128,1], index: 11, kind: input, shape index: {}]
  %s12 = inlined_call_operand.vmem [shape: f32[16,64], index: 12, kind: input, shape index: {}]
  %s13 = inlined_call_operand.vmem [shape: f32[16,64], index: 13, kind: input, shape index: {}]
  %s14 = inlined_call_operand.hbm [shape: f32[2,4,64], index: 14, kind: output, shape index: {}]
  %s15 = sld [smem:[#allocation0]]
  $region89: #{decoder2_forward.1} parent=0
    _
  %s17 = ssub.s32 1, %s15
  %s18 = scalar_select 0, %s17, %s15
  $region1: #{decoder2_forward.1} parent=0
    #allocation4 [shape = 'u8[4096]{0}', space=vmem, size = 0x1000, scoped, tag = 'output window, operand 0']
    #allocation5 [shape = 's32[2]{0}', space=sflag, size = 0x8, scoped, tag = 'scoped memory for decoder2_forward.1']
    %19 = vsyncpa [#allocation5], 0
    %s20 = scalar_lea.sflag [#allocation5], 1
    %21 = vsyncpa %s20, 0
    loop: start=0, step=1, limit=4
    $region2: #{decoder2_forward.1} parent=1 // loop_pre_header
      _
    $region3: #{decoder2_forward.1} parent=1 // loop_header
      %s23 = sphi 0, %s27
      %p24 = scmp.ge.s32.totalorder %s23, 4
      %s33 = sphi 0, %s35
      %s36 = sphi 0, %s33
      %s37 = sphi 0, %s36
      %s53 = sphi 0, %s37
      %s57 = sphi 0, %s57
      %s59 = sphi 0, %s57
      %s60 = sphi 0, %s59
      %s74 = sphi 0, %s60
      %s78 = sphi 0, %s78
      %s80 = sphi 0, %s78
      %s81 = sphi 0, %s80
      %s95 = sphi 0, %s81
      %s99 = sphi 0, %s99
      %s101 = sphi 0, %s99
      %s102 = sphi 0, %s101
      %s116 = sphi 0, %s102
      %s120 = sphi 0, %s120
      %s122 = sphi 0, %s120
      %s123 = sphi 0, %s122
      %s137 = sphi 0, %s123
      %s141 = sphi 0, %s141
      %s143 = sphi 0, %s141
      %s144 = sphi 0, %s143
      %s158 = sphi 0, %s144
      %s162 = sphi 0, %s162
      %s164 = sphi 0, %s162
      %s165 = sphi 0, %s164
      %s179 = sphi 0, %s165
      %s183 = sphi 0, %s183
      %s185 = sphi 0, %s183
      %s186 = sphi 0, %s185
      %s200 = sphi 0, %s186
      %s204 = sphi 0, %s204
      %s206 = sphi 0, %s204
      %s207 = sphi 0, %s206
      %s221 = sphi 0, %s207
      %s225 = sphi 0, %s225
      %s227 = sphi 0, %s225
      %s228 = sphi 0, %s227
      %s242 = sphi 0, %s228
      %s246 = sphi 0, %s246
      %s248 = sphi 0, %s246
      %s249 = sphi 0, %s248
      %s263 = sphi 0, %s249
      %s267 = sphi 0, %s267
      %s269 = sphi 0, %s267
      %s270 = sphi 0, %s269
      %s284 = sphi 0, %s270
      %s288 = sphi 0, %s288
      %s290 = sphi 0, %s288
      %s291 = sphi 0, %s290
      %s305 = sphi 0, %s291
      %s309 = sphi 0, %s309
      %s311 = sphi 0, %s309
      %s312 = sphi 0, %s311
      %s326 = sphi 0, %s312
      %s332 = sphi 0, %s334
      %s335 = sphi 0, %s332
      %s336 = sphi 0, %s335
      %s352 = sphi 0, %s336
    $region4: #{decoder2_forward.1} parent=1 // loop_header_branch
      %26 = sbr.rel (%p24) target = $region8
    $region5: #{decoder2_forward.1} parent=1 // loop_body
      %s28 = ssub.s32 %s23, 1
      %s29 = ssub.s32 %s23, 2
      %s30 = sadd.s32 %s23, 1
      %s31 = ssub.s32 %s23, %s30
      %p32 = scmp.eq.s32.totalorder %s31, 0
      %s34 = sadd.s32 %s33, 1
      %s35 = scalar_select %p32, %s33, %s34
      %p38 = pneg %p32
      %p39 = scmp.eq.s32.totalorder %s23, 1
      %p40 = por %p38, %p39
      %p41 = scmp.ne.s32.totalorder %s33, %s36
      %p42 = scmp.eq.s32.totalorder %s23, 0
      %p43 = por %p41, %p42
      %p44 = scmp.ne.s32.totalorder %s33, %s36
      %p45 = scmp.eq.s32.totalorder %s28, 1
      %p46 = por %p44, %p45
      %p47 = scmp.ne.s32.totalorder %s36, %s37
      %p48 = scmp.eq.s32.totalorder %s28, 0
      %p49 = por %p47, %p48
      %p50 = scmp.ne.s32.totalorder %s36, %s37
      %p51 = scmp.eq.s32.totalorder %s29, 1
      %p52 = por %p50, %p51
      %p54 = scmp.ne.s32.totalorder %s37, %s53
      %p55 = scmp.eq.s32.totalorder %s29, 0
      %p56 = por %p54, %p55
      %s58 = sadd.s32 %s57, 1
      %p61 = scmp.eq.s32.totalorder %s23, 1
      %p62 = scmp.ne.s32.totalorder %s57, %s59
      %p63 = scmp.eq.s32.totalorder %s23, 0
      %p64 = por %p62, %p63
      %p65 = scmp.ne.s32.totalorder %s57, %s59
      %p66 = scmp.eq.s32.totalorder %s28, 1
      %p67 = por %p65, %p66
      %p68 = scmp.ne.s32.totalorder %s59, %s60
      %p69 = scmp.eq.s32.totalorder %s28, 0
      %p70 = por %p68, %p69
      %p71 = scmp.ne.s32.totalorder %s59, %s60
      %p72 = scmp.eq.s32.totalorder %s29, 1
      %p73 = por %p71, %p72
      %p75 = scmp.ne.s32.totalorder %s60, %s74
      %p76 = scmp.eq.s32.totalorder %s29, 0
      %p77 = por %p75, %p76
      %s79 = sadd.s32 %s78, 1
      %p82 = scmp.eq.s32.totalorder %s23, 1
      %p83 = scmp.ne.s32.totalorder %s78, %s80
      %p84 = scmp.eq.s32.totalorder %s23, 0
      %p85 = por %p83, %p84
      %p86 = scmp.ne.s32.totalorder %s78, %s80
      %p87 = scmp.eq.s32.totalorder %s28, 1
      %p88 = por %p86, %p87
      %p89 = scmp.ne.s32.totalorder %s80, %s81
      %p90 = scmp.eq.s32.totalorder %s28, 0
      %p91 = por %p89, %p90
      %p92 = scmp.ne.s32.totalorder %s80, %s81
      %p93 = scmp.eq.s32.totalorder %s29, 1
      %p94 = por %p92, %p93
      %p96 = scmp.ne.s32.totalorder %s81, %s95
      %p97 = scmp.eq.s32.totalorder %s29, 0
      %p98 = por %p96, %p97
      %s100 = sadd.s32 %s99, 1
      %p103 = scmp.eq.s32.totalorder %s23, 1
      %p104 = scmp.ne.s32.totalorder %s99, %s101
      %p105 = scmp.eq.s32.totalorder %s23, 0
      %p106 = por %p104, %p105
      %p107 = scmp.ne.s32.totalorder %s99, %s101
      %p108 = scmp.eq.s32.totalorder %s28, 1
      %p109 = por %p107, %p108
      %p110 = scmp.ne.s32.totalorder %s101, %s102
      %p111 = scmp.eq.s32.totalorder %s28, 0
      %p112 = por %p110, %p111
      %p113 = scmp.ne.s32.totalorder %s101, %s102
      %p114 = scmp.eq.s32.totalorder %s29, 1
      %p115 = por %p113, %p114
      %p117 = scmp.ne.s32.totalorder %s102, %s116
      %p118 = scmp.eq.s32.totalorder %s29, 0
      %p119 = por %p117, %p118
      %s121 = sadd.s32 %s120, 1
      %p124 = scmp.eq.s32.totalorder %s23, 1
      %p125 = scmp.ne.s32.totalorder %s120, %s122
      %p126 = scmp.eq.s32.totalorder %s23, 0
      %p127 = por %p125, %p126
      %p128 = scmp.ne.s32.totalorder %s120, %s122
      %p129 = scmp.eq.s32.totalorder %s28, 1
      %p130 = por %p128, %p129
      %p131 = scmp.ne.s32.totalorder %s122, %s123
      %p132 = scmp.eq.s32.totalorder %s28, 0
      %p133 = por %p131, %p132
      %p134 = scmp.ne.s32.totalorder %s122, %s123
      %p135 = scmp.eq.s32.totalorder %s29, 1
      %p136 = por %p134, %p135
      %p138 = scmp.ne.s32.totalorder %s123, %s137
      %p139 = scmp.eq.s32.totalorder %s29, 0
      %p140 = por %p138, %p139
      %s142 = sadd.s32 %s141, 1
      %p145 = scmp.eq.s32.totalorder %s23, 1
      %p146 = scmp.ne.s32.totalorder %s141, %s143
      %p147 = scmp.eq.s32.totalorder %s23, 0
      %p148 = por %p146, %p147
      %p149 = scmp.ne.s32.totalorder %s141, %s143
      %p150 = scmp.eq.s32.totalorder %s28, 1
      %p151 = por %p149, %p150
      %p152 = scmp.ne.s32.totalorder %s143, %s144
      %p153 = scmp.eq.s32.totalorder %s28, 0
      %p154 = por %p152, %p153
      %p155 = scmp.ne.s32.totalorder %s143, %s144
      %p156 = scmp.eq.s32.totalorder %s29, 1
      %p157 = por %p155, %p156
      %p159 = scmp.ne.s32.totalorder %s144, %s158
      %p160 = scmp.eq.s32.totalorder %s29, 0
      %p161 = por %p159, %p160
      %s163 = sadd.s32 %s162, 1
      %p166 = scmp.eq.s32.totalorder %s23, 1
      %p167 = scmp.ne.s32.totalorder %s162, %s164
      %p168 = scmp.eq.s32.totalorder %s23, 0
      %p169 = por %p167, %p168
      %p170 = scmp.ne.s32.totalorder %s162, %s164
      %p171 = scmp.eq.s32.totalorder %s28, 1
      %p172 = por %p170, %p171
      %p173 = scmp.ne.s32.totalorder %s164, %s165
      %p174 = scmp.eq.s32.totalorder %s28, 0
      %p175 = por %p173, %p174
      %p176 = scmp.ne.s32.totalorder %s164, %s165
      %p177 = scmp.eq.s32.totalorder %s29, 1
      %p178 = por %p176, %p177
      %p180 = scmp.ne.s32.totalorder %s165, %s179
      %p181 = scmp.eq.s32.totalorder %s29, 0
      %p182 = por %p180, %p181
      %s184 = sadd.s32 %s183, 1
      %p187 = scmp.eq.s32.totalorder %s23, 1
      %p188 = scmp.ne.s32.totalorder %s183, %s185
      %p189 = scmp.eq.s32.totalorder %s23, 0
      %p190 = por %p188, %p189
      %p191 = scmp.ne.s32.totalorder %s183, %s185
      %p192 = scmp.eq.s32.totalorder %s28, 1
      %p193 = por %p191, %p192
      %p194 = scmp.ne.s32.totalorder %s185, %s186
      %p195 = scmp.eq.s32.totalorder %s28, 0
      %p196 = por %p194, %p195
      %p197 = scmp.ne.s32.totalorder %s185, %s186
      %p198 = scmp.eq.s32.totalorder %s29, 1
      %p199 = por %p197, %p198
      %p201 = scmp.ne.s32.totalorder %s186, %s200
      %p202 = scmp.eq.s32.totalorder %s29, 0
      %p203 = por %p201, %p202
      %s205 = sadd.s32 %s204, 1
      %p208 = scmp.eq.s32.totalorder %s23, 1
      %p209 = scmp.ne.s32.totalorder %s204, %s206
      %p210 = scmp.eq.s32.totalorder %s23, 0
      %p211 = por %p209, %p210
      %p212 = scmp.ne.s32.totalorder %s204, %s206
      %p213 = scmp.eq.s32.totalorder %s28, 1
      %p214 = por %p212, %p213
      %p215 = scmp.ne.s32.totalorder %s206, %s207
      %p216 = scmp.eq.s32.totalorder %s28, 0
      %p217 = por %p215, %p216
      %p218 = scmp.ne.s32.totalorder %s206, %s207
      %p219 = scmp.eq.s32.totalorder %s29, 1
      %p220 = por %p218, %p219
      %p222 = scmp.ne.s32.totalorder %s207, %s221
      %p223 = scmp.eq.s32.totalorder %s29, 0
      %p224 = por %p222, %p223
      %s226 = sadd.s32 %s225, 1
      %p229 = scmp.eq.s32.totalorder %s23, 1
      %p230 = scmp.ne.s32.totalorder %s225, %s227
      %p231 = scmp.eq.s32.totalorder %s23, 0
      %p232 = por %p230, %p231
      %p233 = scmp.ne.s32.totalorder %s225, %s227
      %p234 = scmp.eq.s32.totalorder %s28, 1
      %p235 = por %p233, %p234
      %p236 = scmp.ne.s32.totalorder %s227, %s228
      %p237 = scmp.eq.s32.totalorder %s28, 0
      %p238 = por %p236, %p237
      %p239 = scmp.ne.s32.totalorder %s227, %s228
      %p240 = scmp.eq.s32.totalorder %s29, 1
      %p241 = por %p239, %p240
      %p243 = scmp.ne.s32.totalorder %s228, %s242
      %p244 = scmp.eq.s32.totalorder %s29, 0
      %p245 = por %p243, %p244
      %s247 = sadd.s32 %s246, 1
      %p250 = scmp.eq.s32.totalorder %s23, 1
      %p251 = scmp.ne.s32.totalorder %s246, %s248
      %p252 = scmp.eq.s32.totalorder %s23, 0
      %p253 = por %p251, %p252
      %p254 = scmp.ne.s32.totalorder %s246, %s248
      %p255 = scmp.eq.s32.totalorder %s28, 1
      %p256 = por %p254, %p255
      %p257 = scmp.ne.s32.totalorder %s248, %s249
      %p258 = scmp.eq.s32.totalorder %s28, 0
      %p259 = por %p257, %p258
      %p260 = scmp.ne.s32.totalorder %s248, %s249
      %p261 = scmp.eq.s32.totalorder %s29, 1
      %p262 = por %p260, %p261
      %p264 = scmp.ne.s32.totalorder %s249, %s263
      %p265 = scmp.eq.s32.totalorder %s29, 0
      %p266 = por %p264, %p265
      %s268 = sadd.s32 %s267, 1
      %p271 = scmp.eq.s32.totalorder %s23, 1
      %p272 = scmp.ne.s32.totalorder %s267, %s269
      %p273 = scmp.eq.s32.totalorder %s23, 0
      %p274 = por %p272, %p273
      %p275 = scmp.ne.s32.totalorder %s267, %s269
      %p276 = scmp.eq.s32.totalorder %s28, 1
      %p277 = por %p275, %p276
      %p278 = scmp.ne.s32.totalorder %s269, %s270
      %p279 = scmp.eq.s32.totalorder %s28, 0
      %p280 = por %p278, %p279
      %p281 = scmp.ne.s32.totalorder %s269, %s270
      %p282 = scmp.eq.s32.totalorder %s29, 1
      %p283 = por %p281, %p282
      %p285 = scmp.ne.s32.totalorder %s270, %s284
      %p286 = scmp.eq.s32.totalorder %s29, 0
      %p287 = por %p285, %p286
      %s289 = sadd.s32 %s288, 1
      %p292 = scmp.eq.s32.totalorder %s23, 1
      %p293 = scmp.ne.s32.totalorder %s288, %s290
      %p294 = scmp.eq.s32.totalorder %s23, 0
      %p295 = por %p293, %p294
      %p296 = scmp.ne.s32.totalorder %s288, %s290
      %p297 = scmp.eq.s32.totalorder %s28, 1
      %p298 = por %p296, %p297
      %p299 = scmp.ne.s32.totalorder %s290, %s291
      %p300 = scmp.eq.s32.totalorder %s28, 0
      %p301 = por %p299, %p300
      %p302 = scmp.ne.s32.totalorder %s290, %s291
      %p303 = scmp.eq.s32.totalorder %s29, 1
      %p304 = por %p302, %p303
      %p306 = scmp.ne.s32.totalorder %s291, %s305
      %p307 = scmp.eq.s32.totalorder %s29, 0
      %p308 = por %p306, %p307
      %s310 = sadd.s32 %s309, 1
      %p313 = scmp.eq.s32.totalorder %s23, 1
      %p314 = scmp.ne.s32.totalorder %s309, %s311
      %p315 = scmp.eq.s32.totalorder %s23, 0
      %p316 = por %p314, %p315
      %p317 = scmp.ne.s32.totalorder %s309, %s311
      %p318 = scmp.eq.s32.totalorder %s28, 1
      %p319 = por %p317, %p318
      %p320 = scmp.ne.s32.totalorder %s311, %s312
      %p321 = scmp.eq.s32.totalorder %s28, 0
      %p322 = por %p320, %p321
      %p323 = scmp.ne.s32.totalorder %s311, %s312
      %p324 = scmp.eq.s32.totalorder %s29, 1
      %p325 = por %p323, %p324
      %p327 = scmp.ne.s32.totalorder %s312, %s326
      %p328 = scmp.eq.s32.totalorder %s29, 0
      %p329 = por %p327, %p328
      %s330 = ssub.s32 %s23, %s30
      %p331 = scmp.eq.s32.totalorder %s330, 0
      %s333 = sadd.s32 %s332, 1
      %s334 = scalar_select %p331, %s332, %s333
      %p337 = pneg %p331
      %p338 = scmp.eq.s32.totalorder %s23, 1
      %p339 = por %p337, %p338
      %p340 = scmp.ne.s32.totalorder %s332, %s335
      %p341 = scmp.eq.s32.totalorder %s23, 0
      %p342 = por %p340, %p341
      %p343 = scmp.ne.s32.totalorder %s332, %s335
      %p344 = scmp.eq.s32.totalorder %s28, 1
      %p345 = por %p343, %p344
      %p346 = scmp.ne.s32.totalorder %s335, %s336
      %p347 = scmp.eq.s32.totalorder %s28, 0
      %p348 = por %p346, %p347
      %p349 = scmp.ne.s32.totalorder %s335, %s336
      %p350 = scmp.eq.s32.totalorder %s29, 1
      %p351 = por %p349, %p350
      %p353 = scmp.ne.s32.totalorder %s336, %s352
      %p354 = scmp.eq.s32.totalorder %s29, 0
      %p355 = por %p353, %p354
      %p356 = scmp.le.s32.totalorder 1, %s23
      %p357 = scmp.lt.s32.totalorder %s23, 3
      %p358 = pnand %p356, %p357
      %p359 = pneg %p358
      // Predicated region
      $region9: #{decoder2_forward.1} parent=5 // pred_check
        _
      $region10: #{decoder2_forward.1} parent=5 // pred_check_branch
        %361 = sbr.rel (%p358) target = $region12
      $region11: #{decoder2_forward.1} parent=5 // pred_region
        %s362 = ssub.s32 %s23, 1
        // Predicated region
        $region13: #{decoder2_forward.1} parent=11 // pred_check
          %p363 = pneg %p70
        $region14: #{decoder2_forward.1} parent=11 // pred_check_branch
          %365 = sbr.rel (%p363) target = $region16
        $region15: #{decoder2_forward.1} parent=11 // pred_region
          _
        $region16: #{decoder2_forward.1} parent=11 // pred_fallthru
          _
        // Predicated region
        $region17: #{decoder2_forward.1} parent=11 // pred_check
          %p366 = pneg %p91
        $region18: #{decoder2_forward.1} parent=11 // pred_check_branch
          %368 = sbr.rel (%p366) target = $region20
        $region19: #{decoder2_forward.1} parent=11 // pred_region
          _
        $region20: #{decoder2_forward.1} parent=11 // pred_fallthru
          _
        // Predicated region
        $region21: #{decoder2_forward.1} parent=11 // pred_check
          %p369 = pneg %p112
        $region22: #{decoder2_forward.1} parent=11 // pred_check_branch
          %371 = sbr.rel (%p369) target = $region24
        $region23: #{decoder2_forward.1} parent=11 // pred_region
          _
        $region24: #{decoder2_forward.1} parent=11 // pred_fallthru
          _
        // Predicated region
        $region25: #{decoder2_forward.1} parent=11 // pred_check
          %p372 = pneg %p133
        $region26: #{decoder2_forward.1} parent=11 // pred_check_branch
          %374 = sbr.rel (%p372) target = $region28
        $region27: #{decoder2_forward.1} parent=11 // pred_region
          _
        $region28: #{decoder2_forward.1} parent=11 // pred_fallthru
          _
        // Predicated region
        $region29: #{decoder2_forward.1} parent=11 // pred_check
          %p375 = pneg %p154
        $region30: #{decoder2_forward.1} parent=11 // pred_check_branch
          %377 = sbr.rel (%p375) target = $region32
        $region31: #{decoder2_forward.1} parent=11 // pred_region
          _
        $region32: #{decoder2_forward.1} parent=11 // pred_fallthru
          _
        // Predicated region
        $region33: #{decoder2_forward.1} parent=11 // pred_check
          %p378 = pneg %p175
        $region34: #{decoder2_forward.1} parent=11 // pred_check_branch
          %380 = sbr.rel (%p378) target = $region36
        $region35: #{decoder2_forward.1} parent=11 // pred_region
          _
        $region36: #{decoder2_forward.1} parent=11 // pred_fallthru
          _
        // Predicated region
        $region37: #{decoder2_forward.1} parent=11 // pred_check
          %p381 = pneg %p196
        $region38: #{decoder2_forward.1} parent=11 // pred_check_branch
          %383 = sbr.rel (%p381) target = $region40
        $region39: #{decoder2_forward.1} parent=11 // pred_region
          _
        $region40: #{decoder2_forward.1} parent=11 // pred_fallthru
          _
        // Predicated region
        $region41: #{decoder2_forward.1} parent=11 // pred_check
          %p384 = pneg %p217
        $region42: #{decoder2_forward.1} parent=11 // pred_check_branch
          %386 = sbr.rel (%p384) target = $region44
        $region43: #{decoder2_forward.1} parent=11 // pred_region
          _
        $region44: #{decoder2_forward.1} parent=11 // pred_fallthru
          _
        // Predicated region
        $region45: #{decoder2_forward.1} parent=11 // pred_check
          %p387 = pneg %p238
        $region46: #{decoder2_forward.1} parent=11 // pred_check_branch
          %389 = sbr.rel (%p387) target = $region48
        $region47: #{decoder2_forward.1} parent=11 // pred_region
          _
        $region48: #{decoder2_forward.1} parent=11 // pred_fallthru
          _
        // Predicated region
        $region49: #{decoder2_forward.1} parent=11 // pred_check
          %p390 = pneg %p259
        $region50: #{decoder2_forward.1} parent=11 // pred_check_branch
          %392 = sbr.rel (%p390) target = $region52
        $region51: #{decoder2_forward.1} parent=11 // pred_region
          _
        $region52: #{decoder2_forward.1} parent=11 // pred_fallthru
          _
        // Predicated region
        $region53: #{decoder2_forward.1} parent=11 // pred_check
          %p393 = pneg %p280
        $region54: #{decoder2_forward.1} parent=11 // pred_check_branch
          %395 = sbr.rel (%p393) target = $region56
        $region55: #{decoder2_forward.1} parent=11 // pred_region
          _
        $region56: #{decoder2_forward.1} parent=11 // pred_fallthru
          _
        // Predicated region
        $region57: #{decoder2_forward.1} parent=11 // pred_check
          %p396 = pneg %p301
        $region58: #{decoder2_forward.1} parent=11 // pred_check_branch
          %398 = sbr.rel (%p396) target = $region60
        $region59: #{decoder2_forward.1} parent=11 // pred_region
          _
        $region60: #{decoder2_forward.1} parent=11 // pred_fallthru
          _
        // Predicated region
        $region61: #{decoder2_forward.1} parent=11 // pred_check
          %p399 = pneg %p322
        $region62: #{decoder2_forward.1} parent=11 // pred_check_branch
          %401 = sbr.rel (%p399) target = $region64
        $region63: #{decoder2_forward.1} parent=11 // pred_region
          _
        $region64: #{decoder2_forward.1} parent=11 // pred_fallthru
          _
      $region12: #{decoder2_forward.1} parent=5 // pred_fallthru
        _
      %p402 = scmp.lt.s32.totalorder %s23, 2
      // Predicated region
      $region65: #{decoder2_forward.1} parent=5 // pred_check
        %p403 = pneg %p402
      $region66: #{decoder2_forward.1} parent=5 // pred_check_branch
        %405 = sbr.rel (%p403) target = $region68
      $region67: #{decoder2_forward.1} parent=5 // pred_region
        // Predicated region
        $region69: #{decoder2_forward.1} parent=67 // pred_check
          %p406 = pneg %p43
        $region70: #{decoder2_forward.1} parent=67 // pred_check_branch
          %408 = sbr.rel (%p406) target = $region72
        $region71: #{decoder2_forward.1} parent=67 // pred_region
          %p409 = scmp.lt.s32.totalorder %s23, 1
          %s410 = scalar_select %p409, %s23, 1
          %s411 = smul.addr %s410, 2
          %s412 = smul.addr %s411, 8
          %s413 = scalar_lea.vmem %s0, %s412
        $region72: #{decoder2_forward.1} parent=67 // pred_fallthru
          _
      $region68: #{decoder2_forward.1} parent=5 // pred_fallthru
        _
      %p414 = scmp.le.s32.totalorder 1, %s23
      %p415 = scmp.lt.s32.totalorder %s23, 3
      %p416 = pnand %p414, %p415
      %p417 = pneg %p416
      // Predicated region
      $region73: #{decoder2_forward.1} parent=5 // pred_check
        _
      $region74: #{decoder2_forward.1} parent=5 // pred_check_branch
        %419 = sbr.rel (%p416) target = $region76
      $region75: #{decoder2_forward.1} parent=5 // pred_region
        %s420 = ssub.s32 %s23, 1
        %p421 = scmp.lt.s32.totalorder %s28, 1
        %s422 = scalar_select %p421, %s28, 1
        %s423 = smul.addr %s422, 2
        %s424 = smul.addr %s423, 8
        %s425 = scalar_lea.vmem %s0, %s424
        %p426 = pneg %p49
        %p427 = pneg %p46
        %p428 = pneg %p70
        %p429 = pneg %p67
        %p430 = pneg %p91
        %p431 = pneg %p88
        %p432 = pneg %p112
        %p433 = pneg %p109
        %p434 = pneg %p133
        %p435 = pneg %p130
        %p436 = pneg %p154
        %p437 = pneg %p151
        %p438 = pneg %p175
        %p439 = pneg %p172
        %p440 = pneg %p196
        %p441 = pneg %p193
        %p442 = pneg %p217
        %p443 = pneg %p214
        %p444 = pneg %p238
        %p445 = pneg %p235
        %p446 = pneg %p259
        %p447 = pneg %p256
        %p448 = pneg %p280
        %p449 = pneg %p277
        %p450 = pneg %p301
        %p451 = pneg %p298
        %p452 = pneg %p322
        %p453 = pneg %p319
        %p454 = pneg %p348
        %p455 = pneg %p345
        %s456 = sand.u32 %s335, 1
        %s457 = scalar_lea.sflag [#allocation5], %s456
        %s458 = sand.u32 %s335, 1
        %s459 = smul.addr %s458, 4
        %s460 = scalar_lea.vmem [#allocation4], %s459
        %p461 = scmp.lt.s32.totalorder %s28, 1
        %s462 = scalar_select %p461, %s28, 1
        %s463 = smul.addr %s462, 2
        %s464 = smul.addr %s463, 8
        %s465 = scalar_lea.vmem %s0, %s464
        %466 = vst [vmem:[#allocation2] sm:$0xff] 0.0
        %467 = vst [vmem:[#allocation2 + $0x8] sm:$0xff] 0.0
        %468 = vst [vmem:[#allocation2 + $0x10] sm:$0x3] 0.0
        %469 = vst [vmem:[#allocation3] sm:$0xff] 0.0
        %470 = vst [vmem:[#allocation3 + $0x8] sm:$0xff] 0.0
        %471 = vst [vmem:[#allocation3 + $0x10] sm:$0x3] 0.0
        %v472 = vld [vmem:[%s465] sm:$0xff]
        %v473 = vld [vmem:[%s465 + $0x8] sm:$0xff]
        %474 = vst [vmem:[#allocation2 + $0x1] sm:$0xff] %v472
        %475 = vst [vmem:[#allocation2 + $0x9] sm:$0xff] %v473
        %v476 = vld [vmem:[#allocation2] sm:$0xff]
        %v477 = vld [vmem:[#allocation2 + $0x8] sm:$0xff]
        %v478 = vld [vmem:[#allocation2 + $0x1] sm:$0xff]
        %v479 = vld [vmem:[#allocation2 + $0x9] sm:$0xff]
        %v480 = vld [vmem:[#allocation2 + $0x2] sm:$0xff]
        %v481 = vld [vmem:[#allocation2 + $0xa] sm:$0xff]
        %v482 = vld [vmem:[%s1] sm:$0xff]
        %v483 = vld [vmem:[%s1 + $0x8] sm:$0xff]
        %v484 = vld [vmem:[%s1 + $0x10] sm:$0xff]
        %v485 = vld [vmem:[%s1 + $0x18] sm:$0xff]
        %v486 = vld [vmem:[%s1 + $0x20] sm:$0xff]
        %v487 = vld [vmem:[%s1 + $0x28] sm:$0xff]
        %v488 = vld [vmem:[%s1 + $0x30] sm:$0xff]
        %v489 = vld [vmem:[%s1 + $0x38] sm:$0xff]
        %v490 = vld [vmem:[%s1 + $0x40] sm:$0xff]
        %v491 = vld [vmem:[%s1 + $0x48] sm:$0xff]
        %v492 = vld [vmem:[%s1 + $0x50] sm:$0xff]
        %v493 = vld [vmem:[%s1 + $0x58] sm:$0xff]
        %v494 = vld [vmem:[%s1 + $0x60] sm:$0xff]
        %v495 = vld [vmem:[%s1 + $0x68] sm:$0xff]
        %v496 = vld [vmem:[%s1 + $0x70] sm:$0xff]
        %v497 = vld [vmem:[%s1 + $0x78] sm:$0xff]
        %v498 = vld [vmem:[%s1 + $0x80] sm:$0xff]
        %v499 = vld [vmem:[%s1 + $0x88] sm:$0xff]
        %v500 = vld [vmem:[%s1 + $0x90] sm:$0xff]
        %v501 = vld [vmem:[%s1 + $0x98] sm:$0xff]
        %v502 = vld [vmem:[%s1 + $0xa0] sm:$0xff]
        %v503 = vld [vmem:[%s1 + $0xa8] sm:$0xff]
        %v504 = vld [vmem:[%s1 + $0xb0] sm:$0xff]
        %v505 = vld [vmem:[%s1 + $0xb8] sm:$0xff]
        %v506 = vld [vmem:[%s1 + $0xc0] sm:$0xff]
        %v507 = vld [vmem:[%s1 + $0xc8] sm:$0xff]
        %v508 = vld [vmem:[%s1 + $0xd0] sm:$0xff]
        %v509 = vld [vmem:[%s1 + $0xd8] sm:$0xff]
        %v510 = vld [vmem:[%s1 + $0xe0] sm:$0xff]
        %v511 = vld [vmem:[%s1 + $0xe8] sm:$0xff]
        %v512 = vld [vmem:[%s1 + $0xf0] sm:$0xff]
        %v513 = vld [vmem:[%s1 + $0xf8] sm:$0xff]
        %v514 = vld [vmem:[%s1 + $0x100] sm:$0xff]
        %v515 = vld [vmem:[%s1 + $0x108] sm:$0xff]
        %v516 = vld [vmem:[%s1 + $0x110] sm:$0xff]
        %v517 = vld [vmem:[%s1 + $0x118] sm:$0xff]
        %v518 = vld [vmem:[%s1 + $0x120] sm:$0xff]
        %v519 = vld [vmem:[%s1 + $0x128] sm:$0xff]
        %v520 = vld [vmem:[%s1 + $0x130] sm:$0xff]
        %v521 = vld [vmem:[%s1 + $0x138] sm:$0xff]
        %v522 = vld [vmem:[%s1 + $0x140] sm:$0xff]
        %v523 = vld [vmem:[%s1 + $0x148] sm:$0xff]
        %v524 = vld [vmem:[%s1 + $0x150] sm:$0xff]
        %v525 = vld [vmem:[%s1 + $0x158] sm:$0xff]
        %v526 = vld [vmem:[%s1 + $0x160] sm:$0xff]
        %v527 = vld [vmem:[%s1 + $0x168] sm:$0xff]
        %v528 = vld [vmem:[%s1 + $0x170] sm:$0xff]
        %v529 = vld [vmem:[%s1 + $0x178] sm:$0xff]
        %v530 = vld [vmem:[%s2] sm:$0x1]
        %v532 = vlaneseq
        %v533 = vshrl.u32 %v532, 7
        %v534 = vsub.s32 0, %v533
        %v535 = vrot.slane %v530, %v534
        %537 = vmatprep.subr.mxu0 0.0
        %538 = vmatpush1.msra.mxu0 %v497
        %539 = vmatprep.subr.mxu0 0.0
        %540 = vmatpush1.msra.mxu0 %v496
        %541 = vmatprep.subr.mxu0 0.0
        %542 = vmatpush1.msra.mxu0 %v495
        %543 = vmatprep.subr.mxu0 0.0
        %544 = vmatpush1.msra.mxu0 %v494
        %545 = vmatprep.subr.mxu0 0.0
        %546 = vmatpush1.msra.mxu0 %v493
        %547 = vmatprep.subr.mxu0 0.0
        %548 = vmatpush1.msra.mxu0 %v492
        %549 = vmatprep.subr.mxu0 0.0
        %550 = vmatpush1.msra.mxu0 %v491
        %551 = vmatprep.subr.mxu0 0.0
        %552 = vmatpush1.msra.mxu0 %v490
        %553 = vmatprep.subr.mxu0 0.0
        %554 = vmatpush1.msra.mxu0 %v489
        %555 = vmatprep.subr.mxu0 0.0
        %556 = vmatpush1.msra.mxu0 %v488
        %557 = vmatprep.subr.mxu0 0.0
        %558 = vmatpush1.msra.mxu0 %v487
        %559 = vmatprep.subr.mxu0 0.0
        %560 = vmatpush1.msra.mxu0 %v486
        %561 = vmatprep.subr.mxu0 0.0
        %562 = vmatpush1.msra.mxu0 %v485
        %563 = vmatprep.subr.mxu0 0.0
        %564 = vmatpush1.msra.mxu0 %v484
        %565 = vmatprep.subr.mxu0 0.0
        %566 = vmatpush1.msra.mxu0 %v483
        %567 = vmatprep.subr.mxu0 0.0
        %568 = vmatpush1.msra.mxu0 %v482
        %569 = vmatprep.subr.mxu0 0.0
        %570 = vmatpush2.msra.mxu0 %v513
        %571 = vmatprep.subr.mxu0 0.0
        %572 = vmatpush2.msra.mxu0 %v512
        %573 = vmatprep.subr.mxu0 0.0
        %574 = vmatpush2.msra.mxu0 %v511
        %575 = vmatprep.subr.mxu0 0.0
        %576 = vmatpush2.msra.mxu0 %v510
        %577 = vmatprep.subr.mxu0 0.0
        %578 = vmatpush2.msra.mxu0 %v509
        %579 = vmatprep.subr.mxu0 0.0
        %580 = vmatpush2.msra.mxu0 %v508
        %581 = vmatprep.subr.mxu0 0.0
        %582 = vmatpush2.msra.mxu0 %v507
        %583 = vmatprep.subr.mxu0 0.0
        %584 = vmatpush2.msra.mxu0 %v506
        %585 = vmatprep.subr.mxu0 0.0
        %586 = vmatpush2.msra.mxu0 %v505
        %587 = vmatprep.subr.mxu0 0.0
        %588 = vmatpush2.msra.mxu0 %v504
        %589 = vmatprep.subr.mxu0 0.0
        %590 = vmatpush2.msra.mxu0 %v503
        %591 = vmatprep.subr.mxu0 0.0
        %592 = vmatpush2.msra.mxu0 %v502
        %593 = vmatprep.subr.mxu0 0.0
        %594 = vmatpush2.msra.mxu0 %v501
        %595 = vmatprep.subr.mxu0 0.0
        %596 = vmatpush2.msra.mxu0 %v500
        %597 = vmatprep.subr.mxu0 0.0
        %598 = vmatpush2.msra.mxu0 %v499
        %599 = vmatprep.subr.mxu0 0.0
        %600 = vmatpush2.msra.mxu0 %v498
        %601 = vmatprep.mubr.f32.mxu0 %v478
        %602 = vmatmul.mubr.f32.gmra.mxu0 %v476
        %v603 = vpop.f32.mrf.mxu0
        %v604 = vadd.f32 %v535, %v603
        %v605 = vpop.f32.mrf.mxu0
        %606 = vmatprep.mubr.f32.mxu0 %v479
        %607 = vmatmul.mubr.f32.gmra.mxu0 %v477
        %v608 = vpop.f32.mrf.mxu0
        %v609 = vadd.f32 %v535, %v608
        %v610 = vpop.f32.mrf.mxu0
        %611 = vdwg.mxu0
        %612 = vmatprep.subr.mxu0 0.0
        %613 = vmatpush1.msra.mxu0 %v529
        %614 = vmatprep.subr.mxu0 0.0
        %615 = vmatpush1.msra.mxu0 %v528
        %616 = vmatprep.subr.mxu0 0.0
        %617 = vmatpush1.msra.mxu0 %v527
        %618 = vmatprep.subr.mxu0 0.0
        %619 = vmatpush1.msra.mxu0 %v526
        %620 = vmatprep.subr.mxu0 0.0
        %621 = vmatpush1.msra.mxu0 %v525
        %622 = vmatprep.subr.mxu0 0.0
        %623 = vmatpush1.msra.mxu0 %v524
        %624 = vmatprep.subr.mxu0 0.0
        %625 = vmatpush1.msra.mxu0 %v523
        %626 = vmatprep.subr.mxu0 0.0
        %627 = vmatpush1.msra.mxu0 %v522
        %628 = vmatprep.subr.mxu0 0.0
        %629 = vmatpush1.msra.mxu0 %v521
        %630 = vmatprep.subr.mxu0 0.0
        %631 = vmatpush1.msra.mxu0 %v520
        %632 = vmatprep.subr.mxu0 0.0
        %633 = vmatpush1.msra.mxu0 %v519
        %634 = vmatprep.subr.mxu0 0.0
        %635 = vmatpush1.msra.mxu0 %v518
        %636 = vmatprep.subr.mxu0 0.0
        %637 = vmatpush1.msra.mxu0 %v517
        %638 = vmatprep.subr.mxu0 0.0
        %639 = vmatpush1.msra.mxu0 %v516
        %640 = vmatprep.subr.mxu0 0.0
        %641 = vmatpush1.msra.mxu0 %v515
        %642 = vmatprep.subr.mxu0 0.0
        %643 = vmatpush1.msra.mxu0 %v514
        %644 = vmatprep.subr.mxu0 0.0
        %645 = vmatpush2.msra.mxu0 0.0
        %646 = vmatprep.subr.mxu0 0.0
        %647 = vmatpush2.msra.mxu0 0.0
        %648 = vmatprep.subr.mxu0 0.0
        %649 = vmatpush2.msra.mxu0 0.0
        %650 = vmatprep.subr.mxu0 0.0
        %651 = vmatpush2.msra.mxu0 0.0
        %652 = vmatprep.subr.mxu0 0.0
        %653 = vmatpush2.msra.mxu0 0.0
        %654 = vmatprep.subr.mxu0 0.0
        %655 = vmatpush2.msra.mxu0 0.0
        %656 = vmatprep.subr.mxu0 0.0
        %657 = vmatpush2.msra.mxu0 0.0
        %658 = vmatprep.subr.mxu0 0.0
        %659 = vmatpush2.msra.mxu0 0.0
        %660 = vmatprep.subr.mxu0 0.0
        %661 = vmatpush2.msra.mxu0 0.0
        %662 = vmatprep.subr.mxu0 0.0
        %663 = vmatpush2.msra.mxu0 0.0
        %664 = vmatprep.subr.mxu0 0.0
        %665 = vmatpush2.msra.mxu0 0.0
        %666 = vmatprep.subr.mxu0 0.0
        %667 = vmatpush2.msra.mxu0 0.0
        %668 = vmatprep.subr.mxu0 0.0
        %669 = vmatpush2.msra.mxu0 0.0
        %670 = vmatprep.subr.mxu0 0.0
        %671 = vmatpush2.msra.mxu0 0.0
        %672 = vmatprep.subr.mxu0 0.0
        %673 = vmatpush2.msra.mxu0 0.0
        %674 = vmatprep.subr.mxu0 0.0
        %675 = vmatpush2.msra.mxu0 0.0
        %676 = vmatprep.mubr.f32.mxu0 0.0
        %677 = vmatmul.mubr.f32.gmra.mxu0 %v480
        %v678 = vpop.f32.mrf.mxu0
        %v679 = vadd.f32 %v604, %v678
        %v680 = vpop.f32.mrf.mxu0
        %681 = vmatprep.mubr.f32.mxu0 0.0
        %682 = vmatmul.mubr.f32.gmra.mxu0 %v481
        %v683 = vpop.f32.mrf.mxu0
        %v684 = vadd.f32 %v609, %v683
        %v685 = vpop.f32.mrf.mxu0
        %686 = vdwg.mxu0
        %v687 = vmin.f32 %v679, 20.0
        %v688 = vmin.f32 %v684, 20.0
        %v689 = vmul.f32 %v687, 1.442695
        %v690 = vpow.pop %v689
        %v691 = vmul.f32 %v688, 1.442695
        %v692 = vpow.pop %v691
        %v693 = vadd.f32 %v690, 1.0
        %v694 = vadd.f32 %v692, 1.0
        %v695 = vmul.f32 %v693, %v693
        %v696 = vmul.f32 %v694, %v694
        %v697 = vsub.f32 %v695, 1.0
        %v698 = vsub.f32 %v696, 1.0
        %v699 = vmul.f32 %v679, %v697
        %v700 = vmul.f32 %v684, %v698
        %v701 = vadd.f32 %v695, 1.0
        %v702 = vadd.f32 %v696, 1.0
        %v703 = vrcp.pop %v701
        %v704 = vmul.f32 %v699, %v703
        %v705 = vrcp.pop %v702
        %v706 = vmul.f32 %v700, %v705
        %707 = vst [vmem:[#allocation2 + $0x1] sm:$0xff] %v704
        %708 = vst [vmem:[#allocation2 + $0x9] sm:$0xff] %v706
        %v709 = vld [vmem:[#allocation2] sm:$0xff]
        %v710 = vld [vmem:[#allocation2 + $0x8] sm:$0xff]
        %v711 = vld [vmem:[#allocation2 + $0x1] sm:$0xff]
        %v712 = vld [vmem:[#allocation2 + $0x9] sm:$0xff]
        %v713 = vld [vmem:[#allocation2 + $0x2] sm:$0xff]
        %v714 = vld [vmem:[#allocation2 + $0xa] sm:$0xff]
        %v715 = vld [vmem:[%s3] sm:$0xff]
        %v716 = vld [vmem:[%s3 + $0x8] sm:$0xff]
        %v717 = vld [vmem:[%s3 + $0x10] sm:$0xff]
        %v718 = vld [vmem:[%s3 + $0x18] sm:$0xff]
        %v719 = vld [vmem:[%s3 + $0x20] sm:$0xff]
        %v720 = vld [vmem:[%s3 + $0x28] sm:$0xff]
        %v721 = vld [vmem:[%s3 + $0x30] sm:$0xff]
        %v722 = vld [vmem:[%s3 + $0x38] sm:$0xff]
        %v723 = vld [vmem:[%s3 + $0x40] sm:$0xff]
        %v724 = vld [vmem:[%s3 + $0x48] sm:$0xff]
        %v725 = vld [vmem:[%s3 + $0x50] sm:$0xff]
        %v726 = vld [vmem:[%s3 + $0x58] sm:$0xff]
        %v727 = vld [vmem:[%s3 + $0x60] sm:$0xff]
        %v728 = vld [vmem:[%s3 + $0x68] sm:$0xff]
        %v729 = vld [vmem:[%s3 + $0x70] sm:$0xff]
        %v730 = vld [vmem:[%s3 + $0x78] sm:$0xff]
        %v731 = vld [vmem:[%s3 + $0x80] sm:$0xff]
        %v732 = vld [vmem:[%s3 + $0x88] sm:$0xff]
        %v733 = vld [vmem:[%s3 + $0x90] sm:$0xff]
        %v734 = vld [vmem:[%s3 + $0x98] sm:$0xff]
        %v735 = vld [vmem:[%s3 + $0xa0] sm:$0xff]
        %v736 = vld [vmem:[%s3 + $0xa8] sm:$0xff]
        %v737 = vld [vmem:[%s3 + $0xb0] sm:$0xff]
        %v738 = vld [vmem:[%s3 + $0xb8] sm:$0xff]
        %v739 = vld [vmem:[%s3 + $0xc0] sm:$0xff]
        %v740 = vld [vmem:[%s3 + $0xc8] sm:$0xff]
        %v741 = vld [vmem:[%s3 + $0xd0] sm:$0xff]
        %v742 = vld [vmem:[%s3 + $0xd8] sm:$0xff]
        %v743 = vld [vmem:[%s3 + $0xe0] sm:$0xff]
        %v744 = vld [vmem:[%s3 + $0xe8] sm:$0xff]
        %v745 = vld [vmem:[%s3 + $0xf0] sm:$0xff]
        %v746 = vld [vmem:[%s3 + $0xf8] sm:$0xff]
        %v747 = vld [vmem:[%s3 + $0x100] sm:$0xff]
        %v748 = vld [vmem:[%s3 + $0x108] sm:$0xff]
        %v749 = vld [vmem:[%s3 + $0x110] sm:$0xff]
        %v750 = vld [vmem:[%s3 + $0x118] sm:$0xff]
        %v751 = vld [vmem:[%s3 + $0x120] sm:$0xff]
        %v752 = vld [vmem:[%s3 + $0x128] sm:$0xff]
        %v753 = vld [vmem:[%s3 + $0x130] sm:$0xff]
        %v754 = vld [vmem:[%s3 + $0x138] sm:$0xff]
        %v755 = vld [vmem:[%s3 + $0x140] sm:$0xff]
        %v756 = vld [vmem:[%s3 + $0x148] sm:$0xff]
        %v757 = vld [vmem:[%s3 + $0x150] sm:$0xff]
        %v758 = vld [vmem:[%s3 + $0x158] sm:$0xff]
        %v759 = vld [vmem:[%s3 + $0x160] sm:$0xff]
        %v760 = vld [vmem:[%s3 + $0x168] sm:$0xff]
        %v761 = vld [vmem:[%s3 + $0x170] sm:$0xff]
        %v762 = vld [vmem:[%s3 + $0x178] sm:$0xff]
        %v763 = vld [vmem:[%s4] sm:$0x1]
        %v765 = vlaneseq
        %v766 = vshrl.u32 %v765, 7
        %v767 = vsub.s32 0, %v766
        %v768 = vrot.slane %v763, %v767
        %770 = vmatprep.subr.mxu0 0.0
        %771 = vmatpush1.msra.mxu0 %v730
        %772 = vmatprep.subr.mxu0 0.0
        %773 = vmatpush1.msra.mxu0 %v729
        %774 = vmatprep.subr.mxu0 0.0
        %775 = vmatpush1.msra.mxu0 %v728
        %776 = vmatprep.subr.mxu0 0.0
        %777 = vmatpush1.msra.mxu0 %v727
        %778 = vmatprep.subr.mxu0 0.0
        %779 = vmatpush1.msra.mxu0 %v726
        %780 = vmatprep.subr.mxu0 0.0
        %781 = vmatpush1.msra.mxu0 %v725
        %782 = vmatprep.subr.mxu0 0.0
        %783 = vmatpush1.msra.mxu0 %v724
        %784 = vmatprep.subr.mxu0 0.0
        %785 = vmatpush1.msra.mxu0 %v723
        %786 = vmatprep.subr.mxu0 0.0
        %787 = vmatpush1.msra.mxu0 %v722
        %788 = vmatprep.subr.mxu0 0.0
        %789 = vmatpush1.msra.mxu0 %v721
        %790 = vmatprep.subr.mxu0 0.0
        %791 = vmatpush1.msra.mxu0 %v720
        %792 = vmatprep.subr.mxu0 0.0
        %793 = vmatpush1.msra.mxu0 %v719
        %794 = vmatprep.subr.mxu0 0.0
        %795 = vmatpush1.msra.mxu0 %v718
        %796 = vmatprep.subr.mxu0 0.0
        %797 = vmatpush1.msra.mxu0 %v717
        %798 = vmatprep.subr.mxu0 0.0
        %799 = vmatpush1.msra.mxu0 %v716
        %800 = vmatprep.subr.mxu0 0.0
        %801 = vmatpush1.msra.mxu0 %v715
        %802 = vmatprep.subr.mxu0 0.0
        %803 = vmatpush2.msra.mxu0 %v746
        %804 = vmatprep.subr.mxu0 0.0
        %805 = vmatpush2.msra.mxu0 %v745
        %806 = vmatprep.subr.mxu0 0.0
        %807 = vmatpush2.msra.mxu0 %v744
        %808 = vmatprep.subr.mxu0 0.0
        %809 = vmatpush2.msra.mxu0 %v743
        %810 = vmatprep.subr.mxu0 0.0
        %811 = vmatpush2.msra.mxu0 %v742
        %812 = vmatprep.subr.mxu0 0.0
        %813 = vmatpush2.msra.mxu0 %v741
        %814 = vmatprep.subr.mxu0 0.0
        %815 = vmatpush2.msra.mxu0 %v740
        %816 = vmatprep.subr.mxu0 0.0
        %817 = vmatpush2.msra.mxu0 %v739
        %818 = vmatprep.subr.mxu0 0.0
        %819 = vmatpush2.msra.mxu0 %v738
        %820 = vmatprep.subr.mxu0 0.0
        %821 = vmatpush2.msra.mxu0 %v737
        %822 = vmatprep.subr.mxu0 0.0
        %823 = vmatpush2.msra.mxu0 %v736
        %824 = vmatprep.subr.mxu0 0.0
        %825 = vmatpush2.msra.mxu0 %v735
        %826 = vmatprep.subr.mxu0 0.0
        %827 = vmatpush2.msra.mxu0 %v734
        %828 = vmatprep.subr.mxu0 0.0
        %829 = vmatpush2.msra.mxu0 %v733
        %830 = vmatprep.subr.mxu0 0.0
        %831 = vmatpush2.msra.mxu0 %v732
        %832 = vmatprep.subr.mxu0 0.0
        %833 = vmatpush2.msra.mxu0 %v731
        %834 = vmatprep.mubr.f32.mxu0 %v711
        %835 = vmatmul.mubr.f32.gmra.mxu0 %v709
        %v836 = vpop.f32.mrf.mxu0
        %v837 = vadd.f32 %v768, %v836
        %v838 = vpop.f32.mrf.mxu0
        %839 = vmatprep.mubr.f32.mxu0 %v712
        %840 = vmatmul.mubr.f32.gmra.mxu0 %v710
        %v841 = vpop.f32.mrf.mxu0
        %v842 = vadd.f32 %v768, %v841
        %v843 = vpop.f32.mrf.mxu0
        %844 = vdwg.mxu0
        %845 = vmatprep.subr.mxu0 0.0
        %846 = vmatpush1.msra.mxu0 %v762
        %847 = vmatprep.subr.mxu0 0.0
        %848 = vmatpush1.msra.mxu0 %v761
        %849 = vmatprep.subr.mxu0 0.0
        %850 = vmatpush1.msra.mxu0 %v760
        %851 = vmatprep.subr.mxu0 0.0
        %852 = vmatpush1.msra.mxu0 %v759
        %853 = vmatprep.subr.mxu0 0.0
        %854 = vmatpush1.msra.mxu0 %v758
        %855 = vmatprep.subr.mxu0 0.0
        %856 = vmatpush1.msra.mxu0 %v757
        %857 = vmatprep.subr.mxu0 0.0
        %858 = vmatpush1.msra.mxu0 %v756
        %859 = vmatprep.subr.mxu0 0.0
        %860 = vmatpush1.msra.mxu0 %v755
        %861 = vmatprep.subr.mxu0 0.0
        %862 = vmatpush1.msra.mxu0 %v754
        %863 = vmatprep.subr.mxu0 0.0
        %864 = vmatpush1.msra.mxu0 %v753
        %865 = vmatprep.subr.mxu0 0.0
        %866 = vmatpush1.msra.mxu0 %v752
        %867 = vmatprep.subr.mxu0 0.0
        %868 = vmatpush1.msra.mxu0 %v751
        %869 = vmatprep.subr.mxu0 0.0
        %870 = vmatpush1.msra.mxu0 %v750
        %871 = vmatprep.subr.mxu0 0.0
        %872 = vmatpush1.msra.mxu0 %v749
        %873 = vmatprep.subr.mxu0 0.0
        %874 = vmatpush1.msra.mxu0 %v748
        %875 = vmatprep.subr.mxu0 0.0
        %876 = vmatpush1.msra.mxu0 %v747
        %877 = vmatprep.subr.mxu0 0.0
        %878 = vmatpush2.msra.mxu0 0.0
        %879 = vmatprep.subr.mxu0 0.0
        %880 = vmatpush2.msra.mxu0 0.0
        %881 = vmatprep.subr.mxu0 0.0
        %882 = vmatpush2.msra.mxu0 0.0
        %883 = vmatprep.subr.mxu0 0.0
        %884 = vmatpush2.msra.mxu0 0.0
        %885 = vmatprep.subr.mxu0 0.0
        %886 = vmatpush2.msra.mxu0 0.0
        %887 = vmatprep.subr.mxu0 0.0
        %888 = vmatpush2.msra.mxu0 0.0
        %889 = vmatprep.subr.mxu0 0.0
        %890 = vmatpush2.msra.mxu0 0.0
        %891 = vmatprep.subr.mxu0 0.0
        %892 = vmatpush2.msra.mxu0 0.0
        %893 = vmatprep.subr.mxu0 0.0
        %894 = vmatpush2.msra.mxu0 0.0
        %895 = vmatprep.subr.mxu0 0.0
        %896 = vmatpush2.msra.mxu0 0.0
        %897 = vmatprep.subr.mxu0 0.0
        %898 = vmatpush2.msra.mxu0 0.0
        %899 = vmatprep.subr.mxu0 0.0
        %900 = vmatpush2.msra.mxu0 0.0
        %901 = vmatprep.subr.mxu0 0.0
        %902 = vmatpush2.msra.mxu0 0.0
        %903 = vmatprep.subr.mxu0 0.0
        %904 = vmatpush2.msra.mxu0 0.0
        %905 = vmatprep.subr.mxu0 0.0
        %906 = vmatpush2.msra.mxu0 0.0
        %907 = vmatprep.subr.mxu0 0.0
        %908 = vmatpush2.msra.mxu0 0.0
        %909 = vmatprep.mubr.f32.mxu0 0.0
        %910 = vmatmul.mubr.f32.gmra.mxu0 %v713
        %v911 = vpop.f32.mrf.mxu0
        %v912 = vadd.f32 %v837, %v911
        %v913 = vpop.f32.mrf.mxu0
        %914 = vmatprep.mubr.f32.mxu0 0.0
        %915 = vmatmul.mubr.f32.gmra.mxu0 %v714
        %v916 = vpop.f32.mrf.mxu0
        %v917 = vadd.f32 %v842, %v916
        %v918 = vpop.f32.mrf.mxu0
        %919 = vdwg.mxu0
        %v920 = vmin.f32 %v912, 20.0
        %v921 = vmin.f32 %v917, 20.0
        %v922 = vmul.f32 %v920, 1.442695
        %v923 = vpow.pop %v922
        %v924 = vmul.f32 %v921, 1.442695
        %v925 = vpow.pop %v924
        %v926 = vadd.f32 %v923, 1.0
        %v927 = vadd.f32 %v925, 1.0
        %v928 = vmul.f32 %v926, %v926
        %v929 = vmul.f32 %v927, %v927
        %v930 = vsub.f32 %v928, 1.0
        %v931 = vsub.f32 %v929, 1.0
        %v932 = vmul.f32 %v912, %v930
        %v933 = vmul.f32 %v917, %v931
        %v934 = vadd.f32 %v928, 1.0
        %v935 = vadd.f32 %v929, 1.0
        %v936 = vrcp.pop %v934
        %v937 = vmul.f32 %v932, %v936
        %v938 = vrcp.pop %v935
        %v939 = vmul.f32 %v933, %v938
        %940 = vst [vmem:[#allocation3 + $0x1] sm:$0xff] %v937
        %941 = vst [vmem:[#allocation3 + $0x9] sm:$0xff] %v939
        %v942 = vld [vmem:[#allocation2 + $0x1] sm:$0xff]
        %v943 = vld [vmem:[#allocation2 + $0x9] sm:$0xff]
        %v944 = vld [vmem:[#allocation3] sm:$0xff]
        %v945 = vld [vmem:[#allocation3 + $0x8] sm:$0xff]
        %v946 = vld [vmem:[#allocation3 + $0x1] sm:$0xff]
        %v947 = vld [vmem:[#allocation3 + $0x9] sm:$0xff]
        %v948 = vld [vmem:[#allocation3 + $0x2] sm:$0xff]
        %v949 = vld [vmem:[#allocation3 + $0xa] sm:$0xff]
        %v950 = vld [vmem:[%s5] sm:$0xff]
        %v951 = vld [vmem:[%s5 + $0x8] sm:$0xff]
        %v952 = vld [vmem:[%s5 + $0x10] sm:$0xff]
        %v953 = vld [vmem:[%s5 + $0x18] sm:$0xff]
        %v954 = vld [vmem:[%s5 + $0x20] sm:$0xff]
        %v955 = vld [vmem:[%s5 + $0x28] sm:$0xff]
        %v956 = vld [vmem:[%s5 + $0x30] sm:$0xff]
        %v957 = vld [vmem:[%s5 + $0x38] sm:$0xff]
        %v958 = vld [vmem:[%s5 + $0x40] sm:$0xff]
        %v959 = vld [vmem:[%s5 + $0x48] sm:$0xff]
        %v960 = vld [vmem:[%s5 + $0x50] sm:$0xff]
        %v961 = vld [vmem:[%s5 + $0x58] sm:$0xff]
        %v962 = vld [vmem:[%s5 + $0x60] sm:$0xff]
        %v963 = vld [vmem:[%s5 + $0x68] sm:$0xff]
        %v964 = vld [vmem:[%s5 + $0x70] sm:$0xff]
        %v965 = vld [vmem:[%s5 + $0x78] sm:$0xff]
        %v966 = vld [vmem:[%s5 + $0x80] sm:$0xff]
        %v967 = vld [vmem:[%s5 + $0x88] sm:$0xff]
        %v968 = vld [vmem:[%s5 + $0x90] sm:$0xff]
        %v969 = vld [vmem:[%s5 + $0x98] sm:$0xff]
        %v970 = vld [vmem:[%s5 + $0xa0] sm:$0xff]
        %v971 = vld [vmem:[%s5 + $0xa8] sm:$0xff]
        %v972 = vld [vmem:[%s5 + $0xb0] sm:$0xff]
        %v973 = vld [vmem:[%s5 + $0xb8] sm:$0xff]
        %v974 = vld [vmem:[%s5 + $0xc0] sm:$0xff]
        %v975 = vld [vmem:[%s5 + $0xc8] sm:$0xff]
        %v976 = vld [vmem:[%s5 + $0xd0] sm:$0xff]
        %v977 = vld [vmem:[%s5 + $0xd8] sm:$0xff]
        %v978 = vld [vmem:[%s5 + $0xe0] sm:$0xff]
        %v979 = vld [vmem:[%s5 + $0xe8] sm:$0xff]
        %v980 = vld [vmem:[%s5 + $0xf0] sm:$0xff]
        %v981 = vld [vmem:[%s5 + $0xf8] sm:$0xff]
        %v982 = vld [vmem:[%s5 + $0x100] sm:$0xff]
        %v983 = vld [vmem:[%s5 + $0x108] sm:$0xff]
        %v984 = vld [vmem:[%s5 + $0x110] sm:$0xff]
        %v985 = vld [vmem:[%s5 + $0x118] sm:$0xff]
        %v986 = vld [vmem:[%s5 + $0x120] sm:$0xff]
        %v987 = vld [vmem:[%s5 + $0x128] sm:$0xff]
        %v988 = vld [vmem:[%s5 + $0x130] sm:$0xff]
        %v989 = vld [vmem:[%s5 + $0x138] sm:$0xff]
        %v990 = vld [vmem:[%s5 + $0x140] sm:$0xff]
        %v991 = vld [vmem:[%s5 + $0x148] sm:$0xff]
        %v992 = vld [vmem:[%s5 + $0x150] sm:$0xff]
        %v993 = vld [vmem:[%s5 + $0x158] sm:$0xff]
        %v994 = vld [vmem:[%s5 + $0x160] sm:$0xff]
        %v995 = vld [vmem:[%s5 + $0x168] sm:$0xff]
        %v996 = vld [vmem:[%s5 + $0x170] sm:$0xff]
        %v997 = vld [vmem:[%s5 + $0x178] sm:$0xff]
        %v998 = vld [vmem:[%s6] sm:$0x1]
        %v1000 = vlaneseq
        %v1001 = vshrl.u32 %v1000, 7
        %v1002 = vsub.s32 0, %v1001
        %v1003 = vrot.slane %v998, %v1002
        %1005 = vmatprep.subr.mxu0 0.0
        %1006 = vmatpush1.msra.mxu0 %v965
        %1007 = vmatprep.subr.mxu0 0.0
        %1008 = vmatpush1.msra.mxu0 %v964
        %1009 = vmatprep.subr.mxu0 0.0
        %1010 = vmatpush1.msra.mxu0 %v963
        %1011 = vmatprep.subr.mxu0 0.0
        %1012 = vmatpush1.msra.mxu0 %v962
        %1013 = vmatprep.subr.mxu0 0.0
        %1014 = vmatpush1.msra.mxu0 %v961
        %1015 = vmatprep.subr.mxu0 0.0
        %1016 = vmatpush1.msra.mxu0 %v960
        %1017 = vmatprep.subr.mxu0 0.0
        %1018 = vmatpush1.msra.mxu0 %v959
        %1019 = vmatprep.subr.mxu0 0.0
        %1020 = vmatpush1.msra.mxu0 %v958
        %1021 = vmatprep.subr.mxu0 0.0
        %1022 = vmatpush1.msra.mxu0 %v957
        %1023 = vmatprep.subr.mxu0 0.0
        %1024 = vmatpush1.msra.mxu0 %v956
        %1025 = vmatprep.subr.mxu0 0.0
        %1026 = vmatpush1.msra.mxu0 %v955
        %1027 = vmatprep.subr.mxu0 0.0
        %1028 = vmatpush1.msra.mxu0 %v954
        %1029 = vmatprep.subr.mxu0 0.0
        %1030 = vmatpush1.msra.mxu0 %v953
        %1031 = vmatprep.subr.mxu0 0.0
        %1032 = vmatpush1.msra.mxu0 %v952
        %1033 = vmatprep.subr.mxu0 0.0
        %1034 = vmatpush1.msra.mxu0 %v951
        %1035 = vmatprep.subr.mxu0 0.0
        %1036 = vmatpush1.msra.mxu0 %v950
        %1037 = vmatprep.subr.mxu0 0.0
        %1038 = vmatpush2.msra.mxu0 %v981
        %1039 = vmatprep.subr.mxu0 0.0
        %1040 = vmatpush2.msra.mxu0 %v980
        %1041 = vmatprep.subr.mxu0 0.0
        %1042 = vmatpush2.msra.mxu0 %v979
        %1043 = vmatprep.subr.mxu0 0.0
        %1044 = vmatpush2.msra.mxu0 %v978
        %1045 = vmatprep.subr.mxu0 0.0
        %1046 = vmatpush2.msra.mxu0 %v977
        %1047 = vmatprep.subr.mxu0 0.0
        %1048 = vmatpush2.msra.mxu0 %v976
        %1049 = vmatprep.subr.mxu0 0.0
        %1050 = vmatpush2.msra.mxu0 %v975
        %1051 = vmatprep.subr.mxu0 0.0
        %1052 = vmatpush2.msra.mxu0 %v974
        %1053 = vmatprep.subr.mxu0 0.0
        %1054 = vmatpush2.msra.mxu0 %v973
        %1055 = vmatprep.subr.mxu0 0.0
        %1056 = vmatpush2.msra.mxu0 %v972
        %1057 = vmatprep.subr.mxu0 0.0
        %1058 = vmatpush2.msra.mxu0 %v971
        %1059 = vmatprep.subr.mxu0 0.0
        %1060 = vmatpush2.msra.mxu0 %v970
        %1061 = vmatprep.subr.mxu0 0.0
        %1062 = vmatpush2.msra.mxu0 %v969
        %1063 = vmatprep.subr.mxu0 0.0
        %1064 = vmatpush2.msra.mxu0 %v968
        %1065 = vmatprep.subr.mxu0 0.0
        %1066 = vmatpush2.msra.mxu0 %v967
        %1067 = vmatprep.subr.mxu0 0.0
        %1068 = vmatpush2.msra.mxu0 %v966
        %1069 = vmatprep.mubr.f32.mxu0 %v946
        %1070 = vmatmul.mubr.f32.gmra.mxu0 %v944
        %v1071 = vpop.f32.mrf.mxu0
        %v1072 = vadd.f32 %v1003, %v1071
        %v1073 = vpop.f32.mrf.mxu0
        %1074 = vmatprep.mubr.f32.mxu0 %v947
        %1075 = vmatmul.mubr.f32.gmra.mxu0 %v945
        %v1076 = vpop.f32.mrf.mxu0
        %v1077 = vadd.f32 %v1003, %v1076
        %v1078 = vpop.f32.mrf.mxu0
        %1079 = vdwg.mxu0
        %1080 = vmatprep.subr.mxu0 0.0
        %1081 = vmatpush1.msra.mxu0 %v997
        %1082 = vmatprep.subr.mxu0 0.0
        %1083 = vmatpush1.msra.mxu0 %v996
        %1084 = vmatprep.subr.mxu0 0.0
        %1085 = vmatpush1.msra.mxu0 %v995
        %1086 = vmatprep.subr.mxu0 0.0
        %1087 = vmatpush1.msra.mxu0 %v994
        %1088 = vmatprep.subr.mxu0 0.0
        %1089 = vmatpush1.msra.mxu0 %v993
        %1090 = vmatprep.subr.mxu0 0.0
        %1091 = vmatpush1.msra.mxu0 %v992
        %1092 = vmatprep.subr.mxu0 0.0
        %1093 = vmatpush1.msra.mxu0 %v991
        %1094 = vmatprep.subr.mxu0 0.0
        %1095 = vmatpush1.msra.mxu0 %v990
        %1096 = vmatprep.subr.mxu0 0.0
        %1097 = vmatpush1.msra.mxu0 %v989
        %1098 = vmatprep.subr.mxu0 0.0
        %1099 = vmatpush1.msra.mxu0 %v988
        %1100 = vmatprep.subr.mxu0 0.0
        %1101 = vmatpush1.msra.mxu0 %v987
        %1102 = vmatprep.subr.mxu0 0.0
        %1103 = vmatpush1.msra.mxu0 %v986
        %1104 = vmatprep.subr.mxu0 0.0
        %1105 = vmatpush1.msra.mxu0 %v985
        %1106 = vmatprep.subr.mxu0 0.0
        %1107 = vmatpush1.msra.mxu0 %v984
        %1108 = vmatprep.subr.mxu0 0.0
        %1109 = vmatpush1.msra.mxu0 %v983
        %1110 = vmatprep.subr.mxu0 0.0
        %1111 = vmatpush1.msra.mxu0 %v982
        %1112 = vmatprep.subr.mxu0 0.0
        %1113 = vmatpush2.msra.mxu0 0.0
        %1114 = vmatprep.subr.mxu0 0.0
        %1115 = vmatpush2.msra.mxu0 0.0
        %1116 = vmatprep.subr.mxu0 0.0
        %1117 = vmatpush2.msra.mxu0 0.0
        %1118 = vmatprep.subr.mxu0 0.0
        %1119 = vmatpush2.msra.mxu0 0.0
        %1120 = vmatprep.subr.mxu0 0.0
        %1121 = vmatpush2.msra.mxu0 0.0
        %1122 = vmatprep.subr.mxu0 0.0
        %1123 = vmatpush2.msra.mxu0 0.0
        %1124 = vmatprep.subr.mxu0 0.0
        %1125 = vmatpush2.msra.mxu0 0.0
        %1126 = vmatprep.subr.mxu0 0.0
        %1127 = vmatpush2.msra.mxu0 0.0
        %1128 = vmatprep.subr.mxu0 0.0
        %1129 = vmatpush2.msra.mxu0 0.0
        %1130 = vmatprep.subr.mxu0 0.0
        %1131 = vmatpush2.msra.mxu0 0.0
        %1132 = vmatprep.subr.mxu0 0.0
        %1133 = vmatpush2.msra.mxu0 0.0
        %1134 = vmatprep.subr.mxu0 0.0
        %1135 = vmatpush2.msra.mxu0 0.0
        %1136 = vmatprep.subr.mxu0 0.0
        %1137 = vmatpush2.msra.mxu0 0.0
        %1138 = vmatprep.subr.mxu0 0.0
        %1139 = vmatpush2.msra.mxu0 0.0
        %1140 = vmatprep.subr.mxu0 0.0
        %1141 = vmatpush2.msra.mxu0 0.0
        %1142 = vmatprep.subr.mxu0 0.0
        %1143 = vmatpush2.msra.mxu0 0.0
        %1144 = vmatprep.mubr.f32.mxu0 0.0
        %1145 = vmatmul.mubr.f32.gmra.mxu0 %v948
        %v1146 = vpop.f32.mrf.mxu0
        %v1147 = vadd.f32 %v1072, %v1146
        %v1148 = vpop.f32.mrf.mxu0
        %1149 = vmatprep.mubr.f32.mxu0 0.0
        %1150 = vmatmul.mubr.f32.gmra.mxu0 %v949
        %v1151 = vpop.f32.mrf.mxu0
        %v1152 = vadd.f32 %v1077, %v1151
        %v1153 = vpop.f32.mrf.mxu0
        %1154 = vdwg.mxu0
        %v1155 = vadd.f32 %v1147, %v942
        %v1156 = vadd.f32 %v1152, %v943
        %v1157 = vmin.f32 %v1155, 20.0
        %v1158 = vmin.f32 %v1156, 20.0
        %v1159 = vmul.f32 %v1157, 1.442695
        %v1160 = vpow.pop %v1159
        %v1161 = vmul.f32 %v1158, 1.442695
        %v1162 = vpow.pop %v1161
        %v1163 = vadd.f32 %v1160, 1.0
        %v1164 = vadd.f32 %v1162, 1.0
        %v1165 = vmul.f32 %v1163, %v1163
        %v1166 = vmul.f32 %v1164, %v1164
        %v1167 = vsub.f32 %v1165, 1.0
        %v1168 = vsub.f32 %v1166, 1.0
        %v1169 = vmul.f32 %v1155, %v1167
        %v1170 = vmul.f32 %v1156, %v1168
        %v1171 = vadd.f32 %v1165, 1.0
        %v1172 = vadd.f32 %v1166, 1.0
        %v1173 = vrcp.pop %v1171
        %v1174 = vmul.f32 %v1169, %v1173
        %v1175 = vrcp.pop %v1172
        %v1176 = vmul.f32 %v1170, %v1175
        %1177 = vst [vmem:[#allocation2 + $0x1] sm:$0xff] %v1174
        %1178 = vst [vmem:[#allocation2 + $0x9] sm:$0xff] %v1176
        %v1179 = vld [vmem:[#allocation2] sm:$0xff]
        %v1180 = vld [vmem:[#allocation2 + $0x8] sm:$0xff]
        %v1181 = vld [vmem:[#allocation2 + $0x1] sm:$0xff]
        %v1182 = vld [vmem:[#allocation2 + $0x9] sm:$0xff]
        %v1183 = vld [vmem:[#allocation2 + $0x2] sm:$0xff]
        %v1184 = vld [vmem:[#allocation2 + $0xa] sm:$0xff]
        %v1185 = vld [vmem:[%s7] sm:$0xff]
        %v1186 = vld [vmem:[%s7 + $0x8] sm:$0xff]
        %v1187 = vld [vmem:[%s7 + $0x10] sm:$0xff]
        %v1188 = vld [vmem:[%s7 + $0x18] sm:$0xff]
        %v1189 = vld [vmem:[%s7 + $0x20] sm:$0xff]
        %v1190 = vld [vmem:[%s7 + $0x28] sm:$0xff]
        %v1191 = vld [vmem:[%s7 + $0x30] sm:$0xff]
        %v1192 = vld [vmem:[%s7 + $0x38] sm:$0xff]
        %v1193 = vld [vmem:[%s7 + $0x40] sm:$0xff]
        %v1194 = vld [vmem:[%s7 + $0x48] sm:$0xff]
        %v1195 = vld [vmem:[%s7 + $0x50] sm:$0xff]
        %v1196 = vld [vmem:[%s7 + $0x58] sm:$0xff]
        %v1197 = vld [vmem:[%s7 + $0x60] sm:$0xff]
        %v1198 = vld [vmem:[%s7 + $0x68] sm:$0xff]
        %v1199 = vld [vmem:[%s7 + $0x70] sm:$0xff]
        %v1200 = vld [vmem:[%s7 + $0x78] sm:$0xff]
        %v1201 = vld [vmem:[%s7 + $0x80] sm:$0xff]
        %v1202 = vld [vmem:[%s7 + $0x88] sm:$0xff]
        %v1203 = vld [vmem:[%s7 + $0x90] sm:$0xff]
        %v1204 = vld [vmem:[%s7 + $0x98] sm:$0xff]
        %v1205 = vld [vmem:[%s7 + $0xa0] sm:$0xff]
        %v1206 = vld [vmem:[%s7 + $0xa8] sm:$0xff]
        %v1207 = vld [vmem:[%s7 + $0xb0] sm:$0xff]
        %v1208 = vld [vmem:[%s7 + $0xb8] sm:$0xff]
        %v1209 = vld [vmem:[%s7 + $0xc0] sm:$0xff]
        %v1210 = vld [vmem:[%s7 + $0xc8] sm:$0xff]
        %v1211 = vld [vmem:[%s7 + $0xd0] sm:$0xff]
        %v1212 = vld [vmem:[%s7 + $0xd8] sm:$0xff]
        %v1213 = vld [vmem:[%s7 + $0xe0] sm:$0xff]
        %v1214 = vld [vmem:[%s7 + $0xe8] sm:$0xff]
        %v1215 = vld [vmem:[%s7 + $0xf0] sm:$0xff]
        %v1216 = vld [vmem:[%s7 + $0xf8] sm:$0xff]
        %v1217 = vld [vmem:[%s9] sm:$0x1]
        %v1219 = vlaneseq
        %v1220 = vshrl.u32 %v1219, 7
        %v1221 = vsub.s32 0, %v1220
        %v1222 = vrot.slane %v1217, %v1221
        %1224 = vmatprep.subr.mxu0 0.0
        %1225 = vmatpush1.msra.mxu0 %v1200
        %1226 = vmatprep.subr.mxu0 0.0
        %1227 = vmatpush1.msra.mxu0 %v1199
        %1228 = vmatprep.subr.mxu0 0.0
        %1229 = vmatpush1.msra.mxu0 %v1198
        %1230 = vmatprep.subr.mxu0 0.0
        %1231 = vmatpush1.msra.mxu0 %v1197
        %1232 = vmatprep.subr.mxu0 0.0
        %1233 = vmatpush1.msra.mxu0 %v1196
        %1234 = vmatprep.subr.mxu0 0.0
        %1235 = vmatpush1.msra.mxu0 %v1195
        %1236 = vmatprep.subr.mxu0 0.0
        %1237 = vmatpush1.msra.mxu0 %v1194
        %1238 = vmatprep.subr.mxu0 0.0
        %1239 = vmatpush1.msra.mxu0 %v1193
        %1240 = vmatprep.subr.mxu0 0.0
        %1241 = vmatpush1.msra.mxu0 %v1192
        %1242 = vmatprep.subr.mxu0 0.0
        %1243 = vmatpush1.msra.mxu0 %v1191
        %1244 = vmatprep.subr.mxu0 0.0
        %1245 = vmatpush1.msra.mxu0 %v1190
        %1246 = vmatprep.subr.mxu0 0.0
        %1247 = vmatpush1.msra.mxu0 %v1189
        %1248 = vmatprep.subr.mxu0 0.0
        %1249 = vmatpush1.msra.mxu0 %v1188
        %1250 = vmatprep.subr.mxu0 0.0
        %1251 = vmatpush1.msra.mxu0 %v1187
        %1252 = vmatprep.subr.mxu0 0.0
        %1253 = vmatpush1.msra.mxu0 %v1186
        %1254 = vmatprep.subr.mxu0 0.0
        %1255 = vmatpush1.msra.mxu0 %v1185
        %1256 = vmatprep.subr.mxu0 0.0
        %1257 = vmatpush2.msra.mxu0 %v1216
        %1258 = vmatprep.subr.mxu0 0.0
        %1259 = vmatpush2.msra.mxu0 %v1215
        %1260 = vmatprep.subr.mxu0 0.0
        %1261 = vmatpush2.msra.mxu0 %v1214
        %1262 = vmatprep.subr.mxu0 0.0
        %1263 = vmatpush2.msra.mxu0 %v1213
        %1264 = vmatprep.subr.mxu0 0.0
        %1265 = vmatpush2.msra.mxu0 %v1212
        %1266 = vmatprep.subr.mxu0 0.0
        %1267 = vmatpush2.msra.mxu0 %v1211
        %1268 = vmatprep.subr.mxu0 0.0
        %1269 = vmatpush2.msra.mxu0 %v1210
        %1270 = vmatprep.subr.mxu0 0.0
        %1271 = vmatpush2.msra.mxu0 %v1209
        %1272 = vmatprep.subr.mxu0 0.0
        %1273 = vmatpush2.msra.mxu0 %v1208
        %1274 = vmatprep.subr.mxu0 0.0
        %1275 = vmatpush2.msra.mxu0 %v1207
        %1276 = vmatprep.subr.mxu0 0.0
        %1277 = vmatpush2.msra.mxu0 %v1206
        %1278 = vmatprep.subr.mxu0 0.0
        %1279 = vmatpush2.msra.mxu0 %v1205
        %1280 = vmatprep.subr.mxu0 0.0
        %1281 = vmatpush2.msra.mxu0 %v1204
        %1282 = vmatprep.subr.mxu0 0.0
        %1283 = vmatpush2.msra.mxu0 %v1203
        %1284 = vmatprep.subr.mxu0 0.0
        %1285 = vmatpush2.msra.mxu0 %v1202
        %1286 = vmatprep.subr.mxu0 0.0
        %1287 = vmatpush2.msra.mxu0 %v1201
        %1288 = vmatprep.mubr.f32.mxu0 %v1181
        %1289 = vmatmul.mubr.f32.gmra.mxu0 %v1179
        %v1290 = vpop.f32.mrf.mxu0
        %v1291 = vadd.f32 %v1222, %v1290
        %v1292 = vpop.f32.mrf.mxu0
        %1293 = vmatprep.mubr.f32.mxu0 %v1182
        %1294 = vmatmul.mubr.f32.gmra.mxu0 %v1180
        %v1295 = vpop.f32.mrf.mxu0
        %v1296 = vadd.f32 %v1222, %v1295
        %v1297 = vpop.f32.mrf.mxu0
        %1298 = vdwg.mxu0
        %v1299 = vmin.f32 %v1291, 20.0
        %v1300 = vmin.f32 %v1296, 20.0
        %v1301 = vmul.f32 %v1299, 1.442695
        %v1302 = vpow.pop %v1301
        %v1303 = vmul.f32 %v1300, 1.442695
        %v1304 = vpow.pop %v1303
        %v1305 = vadd.f32 %v1302, 1.0
        %v1306 = vadd.f32 %v1304, 1.0
        %v1307 = vmul.f32 %v1305, %v1305
        %v1308 = vmul.f32 %v1306, %v1306
        %v1309 = vsub.f32 %v1307, 1.0
        %v1310 = vsub.f32 %v1308, 1.0
        %v1311 = vmul.f32 %v1291, %v1309
        %v1312 = vmul.f32 %v1296, %v1310
        %v1313 = vadd.f32 %v1307, 1.0
        %v1314 = vadd.f32 %v1308, 1.0
        %v1315 = vrcp.pop %v1313
        %v1316 = vmul.f32 %v1311, %v1315
        %v1317 = vrcp.pop %v1314
        %v1318 = vmul.f32 %v1312, %v1317
        %v1319 = vld [vmem:[%s8] sm:$0xff]
        %v1320 = vld [vmem:[%s8 + $0x8] sm:$0xff]
        %v1321 = vld [vmem:[%s8 + $0x10] sm:$0xff]
        %v1322 = vld [vmem:[%s8 + $0x18] sm:$0xff]
        %v1323 = vld [vmem:[%s8 + $0x20] sm:$0xff]
        %v1324 = vld [vmem:[%s8 + $0x28] sm:$0xff]
        %v1325 = vld [vmem:[%s8 + $0x30] sm:$0xff]
        %v1326 = vld [vmem:[%s8 + $0x38] sm:$0xff]
        %v1327 = vld [vmem:[%s8 + $0x40] sm:$0xff]
        %v1328 = vld [vmem:[%s8 + $0x48] sm:$0xff]
        %v1329 = vld [vmem:[%s8 + $0x50] sm:$0xff]
        %v1330 = vld [vmem:[%s8 + $0x58] sm:$0xff]
        %v1331 = vld [vmem:[%s8 + $0x60] sm:$0xff]
        %v1332 = vld [vmem:[%s8 + $0x68] sm:$0xff]
        %v1333 = vld [vmem:[%s8 + $0x70] sm:$0xff]
        %v1334 = vld [vmem:[%s8 + $0x78] sm:$0xff]
        %v1335 = vld [vmem:[%s8 + $0x80] sm:$0xff]
        %v1336 = vld [vmem:[%s8 + $0x88] sm:$0xff]
        %v1337 = vld [vmem:[%s8 + $0x90] sm:$0xff]
        %v1338 = vld [vmem:[%s8 + $0x98] sm:$0xff]
        %v1339 = vld [vmem:[%s8 + $0xa0] sm:$0xff]
        %v1340 = vld [vmem:[%s8 + $0xa8] sm:$0xff]
        %v1341 = vld [vmem:[%s8 + $0xb0] sm:$0xff]
        %v1342 = vld [vmem:[%s8 + $0xb8] sm:$0xff]
        %v1343 = vld [vmem:[%s8 + $0xc0] sm:$0xff]
        %v1344 = vld [vmem:[%s8 + $0xc8] sm:$0xff]
        %v1345 = vld [vmem:[%s8 + $0xd0] sm:$0xff]
        %v1346 = vld [vmem:[%s8 + $0xd8] sm:$0xff]
        %v1347 = vld [vmem:[%s8 + $0xe0] sm:$0xff]
        %v1348 = vld [vmem:[%s8 + $0xe8] sm:$0xff]
        %v1349 = vld [vmem:[%s8 + $0xf0] sm:$0xff]
        %v1350 = vld [vmem:[%s8 + $0xf8] sm:$0xff]
        %1351 = vmatprep.subr.mxu0 0.0
        %1352 = vmatpush1.msra.mxu0 %v1334
        %1353 = vmatprep.subr.mxu0 0.0
        %1354 = vmatpush1.msra.mxu0 %v1333
        %1355 = vmatprep.subr.mxu0 0.0
        %1356 = vmatpush1.msra.mxu0 %v1332
        %1357 = vmatprep.subr.mxu0 0.0
        %1358 = vmatpush1.msra.mxu0 %v1331
        %1359 = vmatprep.subr.mxu0 0.0
        %1360 = vmatpush1.msra.mxu0 %v1330
        %1361 = vmatprep.subr.mxu0 0.0
        %1362 = vmatpush1.msra.mxu0 %v1329
        %1363 = vmatprep.subr.mxu0 0.0
        %1364 = vmatpush1.msra.mxu0 %v1328
        %1365 = vmatprep.subr.mxu0 0.0
        %1366 = vmatpush1.msra.mxu0 %v1327
        %1367 = vmatprep.subr.mxu0 0.0
        %1368 = vmatpush1.msra.mxu0 %v1326
        %1369 = vmatprep.subr.mxu0 0.0
        %1370 = vmatpush1.msra.mxu0 %v1325
        %1371 = vmatprep.subr.mxu0 0.0
        %1372 = vmatpush1.msra.mxu0 %v1324
        %1373 = vmatprep.subr.mxu0 0.0
        %1374 = vmatpush1.msra.mxu0 %v1323
        %1375 = vmatprep.subr.mxu0 0.0
        %1376 = vmatpush1.msra.mxu0 %v1322
        %1377 = vmatprep.subr.mxu0 0.0
        %1378 = vmatpush1.msra.mxu0 %v1321
        %1379 = vmatprep.subr.mxu0 0.0
        %1380 = vmatpush1.msra.mxu0 %v1320
        %1381 = vmatprep.subr.mxu0 0.0
        %1382 = vmatpush1.msra.mxu0 %v1319
        %1383 = vmatprep.subr.mxu0 0.0
        %1384 = vmatpush2.msra.mxu0 %v1350
        %1385 = vmatprep.subr.mxu0 0.0
        %1386 = vmatpush2.msra.mxu0 %v1349
        %1387 = vmatprep.subr.mxu0 0.0
        %1388 = vmatpush2.msra.mxu0 %v1348
        %1389 = vmatprep.subr.mxu0 0.0
        %1390 = vmatpush2.msra.mxu0 %v1347
        %1391 = vmatprep.subr.mxu0 0.0
        %1392 = vmatpush2.msra.mxu0 %v1346
        %1393 = vmatprep.subr.mxu0 0.0
        %1394 = vmatpush2.msra.mxu0 %v1345
        %1395 = vmatprep.subr.mxu0 0.0
        %1396 = vmatpush2.msra.mxu0 %v1344
        %1397 = vmatprep.subr.mxu0 0.0
        %1398 = vmatpush2.msra.mxu0 %v1343
        %1399 = vmatprep.subr.mxu0 0.0
        %1400 = vmatpush2.msra.mxu0 %v1342
        %1401 = vmatprep.subr.mxu0 0.0
        %1402 = vmatpush2.msra.mxu0 %v1341
        %1403 = vmatprep.subr.mxu0 0.0
        %1404 = vmatpush2.msra.mxu0 %v1340
        %1405 = vmatprep.subr.mxu0 0.0
        %1406 = vmatpush2.msra.mxu0 %v1339
        %1407 = vmatprep.subr.mxu0 0.0
        %1408 = vmatpush2.msra.mxu0 %v1338
        %1409 = vmatprep.subr.mxu0 0.0
        %1410 = vmatpush2.msra.mxu0 %v1337
        %1411 = vmatprep.subr.mxu0 0.0
        %1412 = vmatpush2.msra.mxu0 %v1336
        %1413 = vmatprep.subr.mxu0 0.0
        %1414 = vmatpush2.msra.mxu0 %v1335
        %1415 = vmatprep.mubr.f32.mxu0 %v1183
        %1416 = vmatmul.mubr.f32.gmra.mxu0 %v1181
        %v1417 = vpop.f32.mrf.mxu0
        %v1418 = vadd.f32 %v1222, %v1417
        %v1419 = vpop.f32.mrf.mxu0
        %1420 = vmatprep.mubr.f32.mxu0 %v1184
        %1421 = vmatmul.mubr.f32.gmra.mxu0 %v1182
        %v1422 = vpop.f32.mrf.mxu0
        %v1423 = vadd.f32 %v1222, %v1422
        %v1424 = vpop.f32.mrf.mxu0
        %1425 = vdwg.mxu0
        %v1426 = vmin.f32 %v1418, 20.0
        %v1427 = vmin.f32 %v1423, 20.0
        %v1428 = vmul.f32 %v1426, 1.442695
        %v1429 = vpow.pop %v1428
        %v1430 = vmul.f32 %v1427, 1.442695
        %v1431 = vpow.pop %v1430
        %v1432 = vadd.f32 %v1429, 1.0
        %v1433 = vadd.f32 %v1431, 1.0
        %v1434 = vmul.f32 %v1432, %v1432
        %v1435 = vmul.f32 %v1433, %v1433
        %v1436 = vsub.f32 %v1434, 1.0
        %v1437 = vsub.f32 %v1435, 1.0
        %v1438 = vmul.f32 %v1418, %v1436
        %v1439 = vmul.f32 %v1423, %v1437
        %v1440 = vadd.f32 %v1434, 1.0
        %v1441 = vadd.f32 %v1435, 1.0
        %v1442 = vrcp.pop %v1440
        %v1443 = vmul.f32 %v1438, %v1442
        %v1444 = vrcp.pop %v1441
        %v1445 = vmul.f32 %v1439, %v1444
        %1446 = vst [vmem:[#allocation3 + $0x1] sm:$0xff] %v1316
        %1447 = vst [vmem:[#allocation3 + $0x9] sm:$0xff] %v1318
        %1448 = vst [vmem:[#allocation2 + $0x1] sm:$0xff] %v1443
        %1449 = vst [vmem:[#allocation2 + $0x9] sm:$0xff] %v1445
        %v1450 = vld [vmem:[#allocation2] sm:$0xff]
        %v1451 = vld [vmem:[#allocation2 + $0x8] sm:$0xff]
        %v1452 = vld [vmem:[#allocation3 + $0x1] sm:$0xff]
        %v1453 = vld [vmem:[#allocation3 + $0x9] sm:$0xff]
        %v1454 = vld [vmem:[#allocation2 + $0x1] sm:$0xff]
        %v1455 = vld [vmem:[#allocation2 + $0x9] sm:$0xff]
        %v1456 = vld [vmem:[#allocation3 + $0x2] sm:$0xff]
        %v1457 = vld [vmem:[#allocation3 + $0xa] sm:$0xff]
        %v1458 = vld [vmem:[%s10] sm:$0xff]
        %v1459 = vld [vmem:[%s10 + $0x8] sm:$0xff]
        %v1460 = vld [vmem:[%s10 + $0x10] sm:$0xff]
        %v1461 = vld [vmem:[%s10 + $0x18] sm:$0xff]
        %v1462 = vld [vmem:[%s10 + $0x20] sm:$0xff]
        %v1463 = vld [vmem:[%s10 + $0x28] sm:$0xff]
        %v1464 = vld [vmem:[%s10 + $0x30] sm:$0xff]
        %v1465 = vld [vmem:[%s10 + $0x38] sm:$0xff]
        %v1466 = vld [vmem:[%s10 + $0x40] sm:$0xff]
        %v1467 = vld [vmem:[%s10 + $0x48] sm:$0xff]
        %v1468 = vld [vmem:[%s10 + $0x50] sm:$0xff]
        %v1469 = vld [vmem:[%s10 + $0x58] sm:$0xff]
        %v1470 = vld [vmem:[%s10 + $0x60] sm:$0xff]
        %v1471 = vld [vmem:[%s10 + $0x68] sm:$0xff]
        %v1472 = vld [vmem:[%s10 + $0x70] sm:$0xff]
        %v1473 = vld [vmem:[%s10 + $0x78] sm:$0xff]
        %v1474 = vld [vmem:[%s10 + $0x80] sm:$0xff]
        %v1475 = vld [vmem:[%s10 + $0x88] sm:$0xff]
        %v1476 = vld [vmem:[%s10 + $0x90] sm:$0xff]
        %v1477 = vld [vmem:[%s10 + $0x98] sm:$0xff]
        %v1478 = vld [vmem:[%s10 + $0xa0] sm:$0xff]
        %v1479 = vld [vmem:[%s10 + $0xa8] sm:$0xff]
        %v1480 = vld [vmem:[%s10 + $0xb0] sm:$0xff]
        %v1481 = vld [vmem:[%s10 + $0xb8] sm:$0xff]
        %v1482 = vld [vmem:[%s10 + $0xc0] sm:$0xff]
        %v1483 = vld [vmem:[%s10 + $0xc8] sm:$0xff]
        %v1484 = vld [vmem:[%s10 + $0xd0] sm:$0xff]
        %v1485 = vld [vmem:[%s10 + $0xd8] sm:$0xff]
        %v1486 = vld [vmem:[%s10 + $0xe0] sm:$0xff]
        %v1487 = vld [vmem:[%s10 + $0xe8] sm:$0xff]
        %v1488 = vld [vmem:[%s10 + $0xf0] sm:$0xff]
        %v1489 = vld [vmem:[%s10 + $0xf8] sm:$0xff]
        %v1490 = vld [vmem:[%s10 + $0x100] sm:$0xff]
        %v1491 = vld [vmem:[%s10 + $0x108] sm:$0xff]
        %v1492 = vld [vmem:[%s10 + $0x110] sm:$0xff]
        %v1493 = vld [vmem:[%s10 + $0x118] sm:$0xff]
        %v1494 = vld [vmem:[%s10 + $0x120] sm:$0xff]
        %v1495 = vld [vmem:[%s10 + $0x128] sm:$0xff]
        %v1496 = vld [vmem:[%s10 + $0x130] sm:$0xff]
        %v1497 = vld [vmem:[%s10 + $0x138] sm:$0xff]
        %v1498 = vld [vmem:[%s10 + $0x140] sm:$0xff]
        %v1499 = vld [vmem:[%s10 + $0x148] sm:$0xff]
        %v1500 = vld [vmem:[%s10 + $0x150] sm:$0xff]
        %v1501 = vld [vmem:[%s10 + $0x158] sm:$0xff]
        %v1502 = vld [vmem:[%s10 + $0x160] sm:$0xff]
        %v1503 = vld [vmem:[%s10 + $0x168] sm:$0xff]
        %v1504 = vld [vmem:[%s10 + $0x170] sm:$0xff]
        %v1505 = vld [vmem:[%s10 + $0x178] sm:$0xff]
        %1506 = vmatprep.subr.mxu0 0.0
        %1507 = vmatpush1.xpose.msra.mxu0 0.0
        %1508 = vmatprep.subr.mxu0 0.0
        %1509 = vmatpush1.xpose.msra.mxu0 0.0
        %1510 = vmatprep.subr.mxu0 0.0
        %1511 = vmatpush1.xpose.msra.mxu0 0.0
        %1512 = vmatprep.subr.mxu0 0.0
        %1513 = vmatpush1.xpose.msra.mxu0 0.0
        %1514 = vmatprep.subr.mxu0 0.0
        %1515 = vmatpush1.xpose.msra.mxu0 0.0
        %1516 = vmatprep.subr.mxu0 0.0
        %1517 = vmatpush1.xpose.msra.mxu0 0.0
        %1518 = vmatprep.subr.mxu0 0.0
        %1519 = vmatpush1.xpose.msra.mxu0 0.0
        %1520 = vmatprep.subr.mxu0 0.0
        %1521 = vmatpush1.xpose.msra.mxu0 0.0
        %1522 = vmatprep.subr.mxu0 0.0
        %1523 = vmatpush1.xpose.msra.mxu0 0.0
        %1524 = vmatprep.subr.mxu0 0.0
        %1525 = vmatpush1.xpose.msra.mxu0 0.0
        %1526 = vmatprep.subr.mxu0 0.0
        %1527 = vmatpush1.xpose.msra.mxu0 0.0
        %1528 = vmatprep.subr.mxu0 0.0
        %1529 = vmatpush1.xpose.msra.mxu0 0.0
        %1530 = vmatprep.subr.mxu0 0.0
        %1531 = vmatpush1.xpose.msra.mxu0 0.0
        %1532 = vmatprep.subr.mxu0 0.0
        %1533 = vmatpush1.xpose.msra.mxu0 0.0
        %1534 = vmatprep.subr.mxu0 %v1453
        %1535 = vmatpush1.xpose.msra.mxu0 %v1451
        %1536 = vmatprep.subr.mxu0 %v1452
        %1537 = vmatpush1.xpose.msra.mxu0 %v1450
        %1538 = vmatprep.subr.mxu0 0.0
        %1539 = vmatpush2.xpose.msra.mxu0 0.0
        %1540 = vmatprep.subr.mxu0 0.0
        %1541 = vmatpush2.xpose.msra.mxu0 0.0
        %1542 = vmatprep.subr.mxu0 0.0
        %1543 = vmatpush2.xpose.msra.mxu0 0.0
        %1544 = vmatprep.subr.mxu0 0.0
        %1545 = vmatpush2.xpose.msra.mxu0 0.0
        %1546 = vmatprep.subr.mxu0 0.0
        %1547 = vmatpush2.xpose.msra.mxu0 0.0
        %1548 = vmatprep.subr.mxu0 0.0
        %1549 = vmatpush2.xpose.msra.mxu0 0.0
        %1550 = vmatprep.subr.mxu0 0.0
        %1551 = vmatpush2.xpose.msra.mxu0 0.0
        %1552 = vmatprep.subr.mxu0 0.0
        %1553 = vmatpush2.xpose.msra.mxu0 0.0
        %1554 = vmatprep.subr.mxu0 0.0
        %1555 = vmatpush2.xpose.msra.mxu0 0.0
        %1556 = vmatprep.subr.mxu0 0.0
        %1557 = vmatpush2.xpose.msra.mxu0 0.0
        %1558 = vmatprep.subr.mxu0 0.0
        %1559 = vmatpush2.xpose.msra.mxu0 0.0
        %1560 = vmatprep.subr.mxu0 0.0
        %1561 = vmatpush2.xpose.msra.mxu0 0.0
        %1562 = vmatprep.subr.mxu0 0.0
        %1563 = vmatpush2.xpose.msra.mxu0 0.0
        %1564 = vmatprep.subr.mxu0 0.0
        %1565 = vmatpush2.xpose.msra.mxu0 0.0
        %1566 = vmatprep.subr.mxu0 0.0
        %1567 = vmatpush2.xpose.msra.mxu0 0.0
        %1568 = vmatprep.subr.mxu0 0.0
        %1569 = vmatpush2.xpose.msra.mxu0 0.0
        %1570 = vmatprep.mubr.f32.mxu0 %v1459
        %1571 = vmatmul.mubr.f32.gmra.mxu0 %v1458
        %v1572 = vpop.f32.mrf.mxu0
        %v1573 = vadd.f32 0.0, %v1572
        %v1574 = vpop.f32.mrf.mxu0
        %1575 = vmatprep.mubr.f32.mxu0 %v1462
        %1576 = vmatmul.mubr.f32.gmra.mxu0 %v1461
        %v1577 = vpop.f32.mrf.mxu0
        %v1578 = vadd.f32 0.0, %v1577
        %v1579 = vpop.f32.mrf.mxu0
        %1580 = vmatprep.mubr.f32.mxu0 %v1465
        %1581 = vmatmul.mubr.f32.gmra.mxu0 %v1464
        %v1582 = vpop.f32.mrf.mxu0
        %v1583 = vadd.f32 0.0, %v1582
        %v1584 = vpop.f32.mrf.mxu0
        %1585 = vmatprep.mubr.f32.mxu0 %v1468
        %1586 = vmatmul.mubr.f32.gmra.mxu0 %v1467
        %v1587 = vpop.f32.mrf.mxu0
        %v1588 = vadd.f32 0.0, %v1587
        %v1589 = vpop.f32.mrf.mxu0
        %1590 = vmatprep.mubr.f32.mxu0 %v1471
        %1591 = vmatmul.mubr.f32.gmra.mxu0 %v1470
        %v1592 = vpop.f32.mrf.mxu0
        %v1593 = vadd.f32 0.0, %v1592
        %v1594 = vpop.f32.mrf.mxu0
        %1595 = vmatprep.mubr.f32.mxu0 %v1474
        %1596 = vmatmul.mubr.f32.gmra.mxu0 %v1473
        %v1597 = vpop.f32.mrf.mxu0
        %v1598 = vadd.f32 0.0, %v1597
        %v1599 = vpop.f32.mrf.mxu0
        %1600 = vmatprep.mubr.f32.mxu0 %v1477
        %1601 = vmatmul.mubr.f32.gmra.mxu0 %v1476
        %v1602 = vpop.f32.mrf.mxu0
        %v1603 = vadd.f32 0.0, %v1602
        %v1604 = vpop.f32.mrf.mxu0
        %1605 = vmatprep.mubr.f32.mxu0 %v1480
        %1606 = vmatmul.mubr.f32.gmra.mxu0 %v1479
        %v1607 = vpop.f32.mrf.mxu0
        %v1608 = vadd.f32 0.0, %v1607
        %v1609 = vpop.f32.mrf.mxu0
        %1610 = vmatprep.mubr.f32.mxu0 %v1483
        %1611 = vmatmul.mubr.f32.gmra.mxu0 %v1482
        %v1612 = vpop.f32.mrf.mxu0
        %v1613 = vadd.f32 0.0, %v1612
        %v1614 = vpop.f32.mrf.mxu0
        %1615 = vmatprep.mubr.f32.mxu0 %v1486
        %1616 = vmatmul.mubr.f32.gmra.mxu0 %v1485
        %v1617 = vpop.f32.mrf.mxu0
        %v1618 = vadd.f32 0.0, %v1617
        %v1619 = vpop.f32.mrf.mxu0
        %1620 = vmatprep.mubr.f32.mxu0 %v1489
        %1621 = vmatmul.mubr.f32.gmra.mxu0 %v1488
        %v1622 = vpop.f32.mrf.mxu0
        %v1623 = vadd.f32 0.0, %v1622
        %v1624 = vpop.f32.mrf.mxu0
        %1625 = vmatprep.mubr.f32.mxu0 %v1492
        %1626 = vmatmul.mubr.f32.gmra.mxu0 %v1491
        %v1627 = vpop.f32.mrf.mxu0
        %v1628 = vadd.f32 0.0, %v1627
        %v1629 = vpop.f32.mrf.mxu0
        %1630 = vmatprep.mubr.f32.mxu0 %v1495
        %1631 = vmatmul.mubr.f32.gmra.mxu0 %v1494
        %v1632 = vpop.f32.mrf.mxu0
        %v1633 = vadd.f32 0.0, %v1632
        %v1634 = vpop.f32.mrf.mxu0
        %1635 = vmatprep.mubr.f32.mxu0 %v1498
        %1636 = vmatmul.mubr.f32.gmra.mxu0 %v1497
        %v1637 = vpop.f32.mrf.mxu0
        %v1638 = vadd.f32 0.0, %v1637
        %v1639 = vpop.f32.mrf.mxu0
        %1640 = vmatprep.mubr.f32.mxu0 %v1501
        %1641 = vmatmul.mubr.f32.gmra.mxu0 %v1500
        %v1642 = vpop.f32.mrf.mxu0
        %v1643 = vadd.f32 0.0, %v1642
        %v1644 = vpop.f32.mrf.mxu0
        %1645 = vmatprep.mubr.f32.mxu0 %v1504
        %1646 = vmatmul.mubr.f32.gmra.mxu0 %v1503
        %v1647 = vpop.f32.mrf.mxu0
        %v1648 = vadd.f32 0.0, %v1647
        %v1649 = vpop.f32.mrf.mxu0
        %1650 = vdwg.mxu0
        %1651 = vmatprep.subr.mxu0 0.0
        %1652 = vmatpush1.xpose.msra.mxu0 0.0
        %1653 = vmatprep.subr.mxu0 0.0
        %1654 = vmatpush1.xpose.msra.mxu0 0.0
        %1655 = vmatprep.subr.mxu0 0.0
        %1656 = vmatpush1.xpose.msra.mxu0 0.0
        %1657 = vmatprep.subr.mxu0 0.0
        %1658 = vmatpush1.xpose.msra.mxu0 0.0
        %1659 = vmatprep.subr.mxu0 0.0
        %1660 = vmatpush1.xpose.msra.mxu0 0.0
        %1661 = vmatprep.subr.mxu0 0.0
        %1662 = vmatpush1.xpose.msra.mxu0 0.0
        %1663 = vmatprep.subr.mxu0 0.0
        %1664 = vmatpush1.xpose.msra.mxu0 0.0
        %1665 = vmatprep.subr.mxu0 0.0
        %1666 = vmatpush1.xpose.msra.mxu0 0.0
        %1667 = vmatprep.subr.mxu0 0.0
        %1668 = vmatpush1.xpose.msra.mxu0 0.0
        %1669 = vmatprep.subr.mxu0 0.0
        %1670 = vmatpush1.xpose.msra.mxu0 0.0
        %1671 = vmatprep.subr.mxu0 0.0
        %1672 = vmatpush1.xpose.msra.mxu0 0.0
        %1673 = vmatprep.subr.mxu0 0.0
        %1674 = vmatpush1.xpose.msra.mxu0 0.0
        %1675 = vmatprep.subr.mxu0 0.0
        %1676 = vmatpush1.xpose.msra.mxu0 0.0
        %1677 = vmatprep.subr.mxu0 0.0
        %1678 = vmatpush1.xpose.msra.mxu0 0.0
        %1679 = vmatprep.subr.mxu0 0.0
        %1680 = vmatpush1.xpose.msra.mxu0 %v1455
        %1681 = vmatprep.subr.mxu0 0.0
        %1682 = vmatpush1.xpose.msra.mxu0 %v1454
        %1683 = vmatprep.subr.mxu0 0.0
        %1684 = vmatpush2.xpose.msra.mxu0 0.0
        %1685 = vmatprep.subr.mxu0 0.0
        %1686 = vmatpush2.xpose.msra.mxu0 0.0
        %1687 = vmatprep.subr.mxu0 0.0
        %1688 = vmatpush2.xpose.msra.mxu0 0.0
        %1689 = vmatprep.subr.mxu0 0.0
        %1690 = vmatpush2.xpose.msra.mxu0 0.0
        %1691 = vmatprep.subr.mxu0 0.0
        %1692 = vmatpush2.xpose.msra.mxu0 0.0
        %1693 = vmatprep.subr.mxu0 0.0
        %1694 = vmatpush2.xpose.msra.mxu0 0.0
        %1695 = vmatprep.subr.mxu0 0.0
        %1696 = vmatpush2.xpose.msra.mxu0 0.0
        %1697 = vmatprep.subr.mxu0 0.0
        %1698 = vmatpush2.xpose.msra.mxu0 0.0
        %1699 = vmatprep.subr.mxu0 0.0
        %1700 = vmatpush2.xpose.msra.mxu0 0.0
        %1701 = vmatprep.subr.mxu0 0.0
        %1702 = vmatpush2.xpose.msra.mxu0 0.0
        %1703 = vmatprep.subr.mxu0 0.0
        %1704 = vmatpush2.xpose.msra.mxu0 0.0
        %1705 = vmatprep.subr.mxu0 0.0
        %1706 = vmatpush2.xpose.msra.mxu0 0.0
        %1707 = vmatprep.subr.mxu0 0.0
        %1708 = vmatpush2.xpose.msra.mxu0 0.0
        %1709 = vmatprep.subr.mxu0 0.0
        %1710 = vmatpush2.xpose.msra.mxu0 0.0
        %1711 = vmatprep.subr.mxu0 0.0
        %1712 = vmatpush2.xpose.msra.mxu0 0.0
        %1713 = vmatprep.subr.mxu0 0.0
        %1714 = vmatpush2.xpose.msra.mxu0 0.0
        %1715 = vmatprep.mubr.f32.mxu0 0.0
        %1716 = vmatmul.mubr.f32.gmra.mxu0 %v1460
        %v1717 = vpop.f32.mrf.mxu0
        %v1718 = vadd.f32 %v1573, %v1717
        %v1719 = vpop.f32.mrf.mxu0
        %1720 = vmatprep.mubr.f32.mxu0 0.0
        %1721 = vmatmul.mubr.f32.gmra.mxu0 %v1463
        %v1722 = vpop.f32.mrf.mxu0
        %v1723 = vadd.f32 %v1578, %v1722
        %v1724 = vpop.f32.mrf.mxu0
        %1725 = vmatprep.mubr.f32.mxu0 0.0
        %1726 = vmatmul.mubr.f32.gmra.mxu0 %v1466
        %v1727 = vpop.f32.mrf.mxu0
        %v1728 = vadd.f32 %v1583, %v1727
        %v1729 = vpop.f32.mrf.mxu0
        %1730 = vmatprep.mubr.f32.mxu0 0.0
        %1731 = vmatmul.mubr.f32.gmra.mxu0 %v1469
        %v1732 = vpop.f32.mrf.mxu0
        %v1733 = vadd.f32 %v1588, %v1732
        %v1734 = vpop.f32.mrf.mxu0
        %1735 = vmatprep.mubr.f32.mxu0 0.0
        %1736 = vmatmul.mubr.f32.gmra.mxu0 %v1472
        %v1737 = vpop.f32.mrf.mxu0
        %v1738 = vadd.f32 %v1593, %v1737
        %v1739 = vpop.f32.mrf.mxu0
        %1740 = vmatprep.mubr.f32.mxu0 0.0
        %1741 = vmatmul.mubr.f32.gmra.mxu0 %v1475
        %v1742 = vpop.f32.mrf.mxu0
        %v1743 = vadd.f32 %v1598, %v1742
        %v1744 = vpop.f32.mrf.mxu0
        %1745 = vmatprep.mubr.f32.mxu0 0.0
        %1746 = vmatmul.mubr.f32.gmra.mxu0 %v1478
        %v1747 = vpop.f32.mrf.mxu0
        %v1748 = vadd.f32 %v1603, %v1747
        %v1749 = vpop.f32.mrf.mxu0
        %1750 = vmatprep.mubr.f32.mxu0 0.0
        %1751 = vmatmul.mubr.f32.gmra.mxu0 %v1481
        %v1752 = vpop.f32.mrf.mxu0
        %v1753 = vadd.f32 %v1608, %v1752
        %v1754 = vpop.f32.mrf.mxu0
        %1755 = vmatprep.mubr.f32.mxu0 0.0
        %1756 = vmatmul.mubr.f32.gmra.mxu0 %v1484
        %v1757 = vpop.f32.mrf.mxu0
        %v1758 = vadd.f32 %v1613, %v1757
        %v1759 = vpop.f32.mrf.mxu0
        %1760 = vmatprep.mubr.f32.mxu0 0.0
        %1761 = vmatmul.mubr.f32.gmra.mxu0 %v1487
        %v1762 = vpop.f32.mrf.mxu0
        %v1763 = vadd.f32 %v1618, %v1762
        %v1764 = vpop.f32.mrf.mxu0
        %1765 = vmatprep.mubr.f32.mxu0 0.0
        %1766 = vmatmul.mubr.f32.gmra.mxu0 %v1490
        %v1767 = vpop.f32.mrf.mxu0
        %v1768 = vadd.f32 %v1623, %v1767
        %v1769 = vpop.f32.mrf.mxu0
        %1770 = vmatprep.mubr.f32.mxu0 0.0
        %1771 = vmatmul.mubr.f32.gmra.mxu0 %v1493
        %v1772 = vpop.f32.mrf.mxu0
        %v1773 = vadd.f32 %v1628, %v1772
        %v1774 = vpop.f32.mrf.mxu0
        %1775 = vmatprep.mubr.f32.mxu0 0.0
        %1776 = vmatmul.mubr.f32.gmra.mxu0 %v1496
        %v1777 = vpop.f32.mrf.mxu0
        %v1778 = vadd.f32 %v1633, %v1777
        %v1779 = vpop.f32.mrf.mxu0
        %1780 = vmatprep.mubr.f32.mxu0 0.0
        %1781 = vmatmul.mubr.f32.gmra.mxu0 %v1499
        %v1782 = vpop.f32.mrf.mxu0
        %v1783 = vadd.f32 %v1638, %v1782
        %v1784 = vpop.f32.mrf.mxu0
        %1785 = vmatprep.mubr.f32.mxu0 0.0
        %1786 = vmatmul.mubr.f32.gmra.mxu0 %v1502
        %v1787 = vpop.f32.mrf.mxu0
        %v1788 = vadd.f32 %v1643, %v1787
        %v1789 = vpop.f32.mrf.mxu0
        %1790 = vmatprep.mubr.f32.mxu0 0.0
        %1791 = vmatmul.mubr.f32.gmra.mxu0 %v1505
        %v1792 = vpop.f32.mrf.mxu0
        %v1793 = vadd.f32 %v1648, %v1792
        %v1794 = vpop.f32.mrf.mxu0
        %1795 = vdwg.mxu0
        %1796 = vmatprep.subr.mxu0 0.0
        %1797 = vmatpush1.xpose.msra.mxu0 0.0
        %1798 = vmatprep.subr.mxu0 0.0
        %1799 = vmatpush1.xpose.msra.mxu0 0.0
        %1800 = vmatprep.subr.mxu0 0.0
        %1801 = vmatpush1.xpose.msra.mxu0 0.0
        %1802 = vmatprep.subr.mxu0 0.0
        %1803 = vmatpush1.xpose.msra.mxu0 0.0
        %1804 = vmatprep.subr.mxu0 0.0
        %1805 = vmatpush1.xpose.msra.mxu0 0.0
        %1806 = vmatprep.subr.mxu0 0.0
        %1807 = vmatpush1.xpose.msra.mxu0 0.0
        %1808 = vmatprep.subr.mxu0 0.0
        %1809 = vmatpush1.xpose.msra.mxu0 0.0
        %1810 = vmatprep.subr.mxu0 0.0
        %1811 = vmatpush1.xpose.msra.mxu0 0.0
        %1812 = vmatprep.subr.mxu0 0.0
        %1813 = vmatpush1.xpose.msra.mxu0 0.0
        %1814 = vmatprep.subr.mxu0 0.0
        %1815 = vmatpush1.xpose.msra.mxu0 0.0
        %1816 = vmatprep.subr.mxu0 0.0
        %1817 = vmatpush1.xpose.msra.mxu0 0.0
        %1818 = vmatprep.subr.mxu0 0.0
        %1819 = vmatpush1.xpose.msra.mxu0 0.0
        %1820 = vmatprep.subr.mxu0 0.0
        %1821 = vmatpush1.xpose.msra.mxu0 0.0
        %1822 = vmatprep.subr.mxu0 0.0
        %1823 = vmatpush1.xpose.msra.mxu0 0.0
        %1824 = vmatprep.subr.mxu0 %v1455
        %1825 = vmatpush1.xpose.msra.mxu0 %v1453
        %1826 = vmatprep.subr.mxu0 %v1454
        %1827 = vmatpush1.xpose.msra.mxu0 %v1452
        %1828 = vmatprep.subr.mxu0 0.0
        %1829 = vmatpush2.xpose.msra.mxu0 0.0
        %1830 = vmatprep.subr.mxu0 0.0
        %1831 = vmatpush2.xpose.msra.mxu0 0.0
        %1832 = vmatprep.subr.mxu0 0.0
        %1833 = vmatpush2.xpose.msra.mxu0 0.0
        %1834 = vmatprep.subr.mxu0 0.0
        %1835 = vmatpush2.xpose.msra.mxu0 0.0
        %1836 = vmatprep.subr.mxu0 0.0
        %1837 = vmatpush2.xpose.msra.mxu0 0.0
        %1838 = vmatprep.subr.mxu0 0.0
        %1839 = vmatpush2.xpose.msra.mxu0 0.0
        %1840 = vmatprep.subr.mxu0 0.0
        %1841 = vmatpush2.xpose.msra.mxu0 0.0
        %1842 = vmatprep.subr.mxu0 0.0
        %1843 = vmatpush2.xpose.msra.mxu0 0.0
        %1844 = vmatprep.subr.mxu0 0.0
        %1845 = vmatpush2.xpose.msra.mxu0 0.0
        %1846 = vmatprep.subr.mxu0 0.0
        %1847 = vmatpush2.xpose.msra.mxu0 0.0
        %1848 = vmatprep.subr.mxu0 0.0
        %1849 = vmatpush2.xpose.msra.mxu0 0.0
        %1850 = vmatprep.subr.mxu0 0.0
        %1851 = vmatpush2.xpose.msra.mxu0 0.0
        %1852 = vmatprep.subr.mxu0 0.0
        %1853 = vmatpush2.xpose.msra.mxu0 0.0
        %1854 = vmatprep.subr.mxu0 0.0
        %1855 = vmatpush2.xpose.msra.mxu0 0.0
        %1856 = vmatprep.subr.mxu0 0.0
        %1857 = vmatpush2.xpose.msra.mxu0 0.0
        %1858 = vmatprep.subr.mxu0 0.0
        %1859 = vmatpush2.xpose.msra.mxu0 0.0
        %1860 = vmatprep.mubr.f32.mxu0 %v1459
        %1861 = vmatmul.mubr.f32.gmra.mxu0 %v1458
        %v1862 = vpop.f32.mrf.mxu0
        %v1863 = vadd.f32 0.0, %v1862
        %v1864 = vpop.f32.mrf.mxu0
        %1865 = vmatprep.mubr.f32.mxu0 %v1462
        %1866 = vmatmul.mubr.f32.gmra.mxu0 %v1461
        %v1867 = vpop.f32.mrf.mxu0
        %v1868 = vadd.f32 0.0, %v1867
        %v1869 = vpop.f32.mrf.mxu0
        %1870 = vmatprep.mubr.f32.mxu0 %v1465
        %1871 = vmatmul.mubr.f32.gmra.mxu0 %v1464
        %v1872 = vpop.f32.mrf.mxu0
        %v1873 = vadd.f32 0.0, %v1872
        %v1874 = vpop.f32.mrf.mxu0
        %1875 = vmatprep.mubr.f32.mxu0 %v1468
        %1876 = vmatmul.mubr.f32.gmra.mxu0 %v1467
        %v1877 = vpop.f32.mrf.mxu0
        %v1878 = vadd.f32 0.0, %v1877
        %v1879 = vpop.f32.mrf.mxu0
        %1880 = vmatprep.mubr.f32.mxu0 %v1471
        %1881 = vmatmul.mubr.f32.gmra.mxu0 %v1470
        %v1882 = vpop.f32.mrf.mxu0
        %v1883 = vadd.f32 0.0, %v1882
        %v1884 = vpop.f32.mrf.mxu0
        %1885 = vmatprep.mubr.f32.mxu0 %v1474
        %1886 = vmatmul.mubr.f32.gmra.mxu0 %v1473
        %v1887 = vpop.f32.mrf.mxu0
        %v1888 = vadd.f32 0.0, %v1887
        %v1889 = vpop.f32.mrf.mxu0
        %1890 = vmatprep.mubr.f32.mxu0 %v1477
        %1891 = vmatmul.mubr.f32.gmra.mxu0 %v1476
        %v1892 = vpop.f32.mrf.mxu0
        %v1893 = vadd.f32 0.0, %v1892
        %v1894 = vpop.f32.mrf.mxu0
        %1895 = vmatprep.mubr.f32.mxu0 %v1480
        %1896 = vmatmul.mubr.f32.gmra.mxu0 %v1479
        %v1897 = vpop.f32.mrf.mxu0
        %v1898 = vadd.f32 0.0, %v1897
        %v1899 = vpop.f32.mrf.mxu0
        %1900 = vmatprep.mubr.f32.mxu0 %v1483
        %1901 = vmatmul.mubr.f32.gmra.mxu0 %v1482
        %v1902 = vpop.f32.mrf.mxu0
        %v1903 = vadd.f32 0.0, %v1902
        %v1904 = vpop.f32.mrf.mxu0
        %1905 = vmatprep.mubr.f32.mxu0 %v1486
        %1906 = vmatmul.mubr.f32.gmra.mxu0 %v1485
        %v1907 = vpop.f32.mrf.mxu0
        %v1908 = vadd.f32 0.0, %v1907
        %v1909 = vpop.f32.mrf.mxu0
        %1910 = vmatprep.mubr.f32.mxu0 %v1489
        %1911 = vmatmul.mubr.f32.gmra.mxu0 %v1488
        %v1912 = vpop.f32.mrf.mxu0
        %v1913 = vadd.f32 0.0, %v1912
        %v1914 = vpop.f32.mrf.mxu0
        %1915 = vmatprep.mubr.f32.mxu0 %v1492
        %1916 = vmatmul.mubr.f32.gmra.mxu0 %v1491
        %v1917 = vpop.f32.mrf.mxu0
        %v1918 = vadd.f32 0.0, %v1917
        %v1919 = vpop.f32.mrf.mxu0
        %1920 = vmatprep.mubr.f32.mxu0 %v1495
        %1921 = vmatmul.mubr.f32.gmra.mxu0 %v1494
        %v1922 = vpop.f32.mrf.mxu0
        %v1923 = vadd.f32 0.0, %v1922
        %v1924 = vpop.f32.mrf.mxu0
        %1925 = vmatprep.mubr.f32.mxu0 %v1498
        %1926 = vmatmul.mubr.f32.gmra.mxu0 %v1497
        %v1927 = vpop.f32.mrf.mxu0
        %v1928 = vadd.f32 0.0, %v1927
        %v1929 = vpop.f32.mrf.mxu0
        %1930 = vmatprep.mubr.f32.mxu0 %v1501
        %1931 = vmatmul.mubr.f32.gmra.mxu0 %v1500
        %v1932 = vpop.f32.mrf.mxu0
        %v1933 = vadd.f32 0.0, %v1932
        %v1934 = vpop.f32.mrf.mxu0
        %1935 = vmatprep.mubr.f32.mxu0 %v1504
        %1936 = vmatmul.mubr.f32.gmra.mxu0 %v1503
        %v1937 = vpop.f32.mrf.mxu0
        %v1938 = vadd.f32 0.0, %v1937
        %v1939 = vpop.f32.mrf.mxu0
        %1940 = vdwg.mxu0
        %1941 = vmatprep.subr.mxu0 0.0
        %1942 = vmatpush1.xpose.msra.mxu0 0.0
        %1943 = vmatprep.subr.mxu0 0.0
        %1944 = vmatpush1.xpose.msra.mxu0 0.0
        %1945 = vmatprep.subr.mxu0 0.0
        %1946 = vmatpush1.xpose.msra.mxu0 0.0
        %1947 = vmatprep.subr.mxu0 0.0
        %1948 = vmatpush1.xpose.msra.mxu0 0.0
        %1949 = vmatprep.subr.mxu0 0.0
        %1950 = vmatpush1.xpose.msra.mxu0 0.0
        %1951 = vmatprep.subr.mxu0 0.0
        %1952 = vmatpush1.xpose.msra.mxu0 0.0
        %1953 = vmatprep.subr.mxu0 0.0
        %1954 = vmatpush1.xpose.msra.mxu0 0.0
        %1955 = vmatprep.subr.mxu0 0.0
        %1956 = vmatpush1.xpose.msra.mxu0 0.0
        %1957 = vmatprep.subr.mxu0 0.0
        %1958 = vmatpush1.xpose.msra.mxu0 0.0
        %1959 = vmatprep.subr.mxu0 0.0
        %1960 = vmatpush1.xpose.msra.mxu0 0.0
        %1961 = vmatprep.subr.mxu0 0.0
        %1962 = vmatpush1.xpose.msra.mxu0 0.0
        %1963 = vmatprep.subr.mxu0 0.0
        %1964 = vmatpush1.xpose.msra.mxu0 0.0
        %1965 = vmatprep.subr.mxu0 0.0
        %1966 = vmatpush1.xpose.msra.mxu0 0.0
        %1967 = vmatprep.subr.mxu0 0.0
        %1968 = vmatpush1.xpose.msra.mxu0 0.0
        %1969 = vmatprep.subr.mxu0 0.0
        %1970 = vmatpush1.xpose.msra.mxu0 %v1457
        %1971 = vmatprep.subr.mxu0 0.0
        %1972 = vmatpush1.xpose.msra.mxu0 %v1456
        %1973 = vmatprep.subr.mxu0 0.0
        %1974 = vmatpush2.xpose.msra.mxu0 0.0
        %1975 = vmatprep.subr.mxu0 0.0
        %1976 = vmatpush2.xpose.msra.mxu0 0.0
        %1977 = vmatprep.subr.mxu0 0.0
        %1978 = vmatpush2.xpose.msra.mxu0 0.0
        %1979 = vmatprep.subr.mxu0 0.0
        %1980 = vmatpush2.xpose.msra.mxu0 0.0
        %1981 = vmatprep.subr.mxu0 0.0
        %1982 = vmatpush2.xpose.msra.mxu0 0.0
        %1983 = vmatprep.subr.mxu0 0.0
        %1984 = vmatpush2.xpose.msra.mxu0 0.0
        %1985 = vmatprep.subr.mxu0 0.0
        %1986 = vmatpush2.xpose.msra.mxu0 0.0
        %1987 = vmatprep.subr.mxu0 0.0
        %1988 = vmatpush2.xpose.msra.mxu0 0.0
        %1989 = vmatprep.subr.mxu0 0.0
        %1990 = vmatpush2.xpose.msra.mxu0 0.0
        %1991 = vmatprep.subr.mxu0 0.0
        %1992 = vmatpush2.xpose.msra.mxu0 0.0
        %1993 = vmatprep.subr.mxu0 0.0
        %1994 = vmatpush2.xpose.msra.mxu0 0.0
        %1995 = vmatprep.subr.mxu0 0.0
        %1996 = vmatpush2.xpose.msra.mxu0 0.0
        %1997 = vmatprep.subr.mxu0 0.0
        %1998 = vmatpush2.xpose.msra.mxu0 0.0
        %1999 = vmatprep.subr.mxu0 0.0
        %2000 = vmatpush2.xpose.msra.mxu0 0.0
        %2001 = vmatprep.subr.mxu0 0.0
        %2002 = vmatpush2.xpose.msra.mxu0 0.0
        %2003 = vmatprep.subr.mxu0 0.0
        %2004 = vmatpush2.xpose.msra.mxu0 0.0
        %2005 = vmatprep.mubr.f32.mxu0 0.0
        %2006 = vmatmul.mubr.f32.gmra.mxu0 %v1460
        %v2007 = vpop.f32.mrf.mxu0
        %v2008 = vadd.f32 %v1863, %v2007
        %v2009 = vpop.f32.mrf.mxu0
        %2010 = vmatprep.mubr.f32.mxu0 0.0
        %2011 = vmatmul.mubr.f32.gmra.mxu0 %v1463
        %v2012 = vpop.f32.mrf.mxu0
        %v2013 = vadd.f32 %v1868, %v2012
        %v2014 = vpop.f32.mrf.mxu0
        %2015 = vmatprep.mubr.f32.mxu0 0.0
        %2016 = vmatmul.mubr.f32.gmra.mxu0 %v1466
        %v2017 = vpop.f32.mrf.mxu0
        %v2018 = vadd.f32 %v1873, %v2017
        %v2019 = vpop.f32.mrf.mxu0
        %2020 = vmatprep.mubr.f32.mxu0 0.0
        %2021 = vmatmul.mubr.f32.gmra.mxu0 %v1469
        %v2022 = vpop.f32.mrf.mxu0
        %v2023 = vadd.f32 %v1878, %v2022
        %v2024 = vpop.f32.mrf.mxu0
        %2025 = vmatprep.mubr.f32.mxu0 0.0
        %2026 = vmatmul.mubr.f32.gmra.mxu0 %v1472
        %v2027 = vpop.f32.mrf.mxu0
        %v2028 = vadd.f32 %v1883, %v2027
        %v2029 = vpop.f32.mrf.mxu0
        %2030 = vmatprep.mubr.f32.mxu0 0.0
        %2031 = vmatmul.mubr.f32.gmra.mxu0 %v1475
        %v2032 = vpop.f32.mrf.mxu0
        %v2033 = vadd.f32 %v1888, %v2032
        %v2034 = vpop.f32.mrf.mxu0
        %2035 = vmatprep.mubr.f32.mxu0 0.0
        %2036 = vmatmul.mubr.f32.gmra.mxu0 %v1478
        %v2037 = vpop.f32.mrf.mxu0
        %v2038 = vadd.f32 %v1893, %v2037
        %v2039 = vpop.f32.mrf.mxu0
        %2040 = vmatprep.mubr.f32.mxu0 0.0
        %2041 = vmatmul.mubr.f32.gmra.mxu0 %v1481
        %v2042 = vpop.f32.mrf.mxu0
        %v2043 = vadd.f32 %v1898, %v2042
        %v2044 = vpop.f32.mrf.mxu0
        %2045 = vmatprep.mubr.f32.mxu0 0.0
        %2046 = vmatmul.mubr.f32.gmra.mxu0 %v1484
        %v2047 = vpop.f32.mrf.mxu0
        %v2048 = vadd.f32 %v1903, %v2047
        %v2049 = vpop.f32.mrf.mxu0
        %2050 = vmatprep.mubr.f32.mxu0 0.0
        %2051 = vmatmul.mubr.f32.gmra.mxu0 %v1487
        %v2052 = vpop.f32.mrf.mxu0
        %v2053 = vadd.f32 %v1908, %v2052
        %v2054 = vpop.f32.mrf.mxu0
        %2055 = vmatprep.mubr.f32.mxu0 0.0
        %2056 = vmatmul.mubr.f32.gmra.mxu0 %v1490
        %v2057 = vpop.f32.mrf.mxu0
        %v2058 = vadd.f32 %v1913, %v2057
        %v2059 = vpop.f32.mrf.mxu0
        %2060 = vmatprep.mubr.f32.mxu0 0.0
        %2061 = vmatmul.mubr.f32.gmra.mxu0 %v1493
        %v2062 = vpop.f32.mrf.mxu0
        %v2063 = vadd.f32 %v1918, %v2062
        %v2064 = vpop.f32.mrf.mxu0
        %2065 = vmatprep.mubr.f32.mxu0 0.0
        %2066 = vmatmul.mubr.f32.gmra.mxu0 %v1496
        %v2067 = vpop.f32.mrf.mxu0
        %v2068 = vadd.f32 %v1923, %v2067
        %v2069 = vpop.f32.mrf.mxu0
        %2070 = vmatprep.mubr.f32.mxu0 0.0
        %2071 = vmatmul.mubr.f32.gmra.mxu0 %v1499
        %v2072 = vpop.f32.mrf.mxu0
        %v2073 = vadd.f32 %v1928, %v2072
        %v2074 = vpop.f32.mrf.mxu0
        %2075 = vmatprep.mubr.f32.mxu0 0.0
        %2076 = vmatmul.mubr.f32.gmra.mxu0 %v1502
        %v2077 = vpop.f32.mrf.mxu0
        %v2078 = vadd.f32 %v1933, %v2077
        %v2079 = vpop.f32.mrf.mxu0
        %2080 = vmatprep.mubr.f32.mxu0 0.0
        %2081 = vmatmul.mubr.f32.gmra.mxu0 %v1505
        %v2082 = vpop.f32.mrf.mxu0
        %v2083 = vadd.f32 %v1938, %v2082
        %v2084 = vpop.f32.mrf.mxu0
        %2085 = vdwg.mxu0
        %v2086 = vld [vmem:[%s12] sm:$0xff]
        %v2087 = vld [vmem:[%s12 + $0x8] sm:$0xff]
        %v2088 = vld [vmem:[%s13] sm:$0xff]
        %v2089 = vld [vmem:[%s13 + $0x8] sm:$0xff]
        %vm2090 = vcmask 130048
        %v2092 = vsel %vm2090, %v2008, 0
        %v2095 = vsel %vm2090, %v2013, 0
        %v2098 = vsel %vm2090, %v2018, 0
        %v2101 = vsel %vm2090, %v2023, 0
        %v2104 = vsel %vm2090, %v2028, 0
        %v2107 = vsel %vm2090, %v2033, 0
        %v2110 = vsel %vm2090, %v2038, 0
        %v2113 = vsel %vm2090, %v2043, 0
        %v2116 = vsel %vm2090, %v2048, 0
        %v2119 = vsel %vm2090, %v2053, 0
        %v2122 = vsel %vm2090, %v2058, 0
        %v2125 = vsel %vm2090, %v2063, 0
        %v2128 = vsel %vm2090, %v2068, 0
        %v2131 = vsel %vm2090, %v2073, 0
        %v2134 = vsel %vm2090, %v2078, 0
        %v2137 = vsel %vm2090, %v2083, 0
        %2139 = vmatprep.subr.mxu0 0.0
        %2140 = vmatpush1.msra.mxu0 0.0
        %2141 = vmatprep.subr.mxu0 0.0
        %2142 = vmatpush1.msra.mxu0 0.0
        %2143 = vmatprep.subr.mxu0 0.0
        %2144 = vmatpush1.msra.mxu0 0.0
        %2145 = vmatprep.subr.mxu0 0.0
        %2146 = vmatpush1.msra.mxu0 0.0
        %2147 = vmatprep.subr.mxu0 0.0
        %2148 = vmatpush1.msra.mxu0 0.0
        %2149 = vmatprep.subr.mxu0 0.0
        %2150 = vmatpush1.msra.mxu0 0.0
        %2151 = vmatprep.subr.mxu0 0.0
        %2152 = vmatpush1.msra.mxu0 0.0
        %2153 = vmatprep.subr.mxu0 0.0
        %2154 = vmatpush1.msra.mxu0 0.0
        %2155 = vmatprep.subr.mxu0 0.0
        %2156 = vmatpush1.msra.mxu0 0.0
        %2157 = vmatprep.subr.mxu0 0.0
        %2158 = vmatpush1.msra.mxu0 0.0
        %2159 = vmatprep.subr.mxu0 0.0
        %2160 = vmatpush1.msra.mxu0 0.0
        %2161 = vmatprep.subr.mxu0 0.0
        %2162 = vmatpush1.msra.mxu0 0.0
        %2163 = vmatprep.subr.mxu0 0.0
        %2164 = vmatpush1.msra.mxu0 0.0
        %2165 = vmatprep.subr.mxu0 0.0
        %2166 = vmatpush1.msra.mxu0 0.0
        %2167 = vmatprep.subr.mxu0 0.0
        %2168 = vmatpush1.msra.mxu0 %v2089
        %2169 = vmatprep.subr.mxu0 0.0
        %2170 = vmatpush1.msra.mxu0 %v2088
        %2171 = vmatprep.subr.mxu0 0.0
        %2172 = vmatpush2.msra.mxu0 0.0
        %2173 = vmatprep.subr.mxu0 0.0
        %2174 = vmatpush2.msra.mxu0 0.0
        %2175 = vmatprep.subr.mxu0 0.0
        %2176 = vmatpush2.msra.mxu0 0.0
        %2177 = vmatprep.subr.mxu0 0.0
        %2178 = vmatpush2.msra.mxu0 0.0
        %2179 = vmatprep.subr.mxu0 0.0
        %2180 = vmatpush2.msra.mxu0 0.0
        %2181 = vmatprep.subr.mxu0 0.0
        %2182 = vmatpush2.msra.mxu0 0.0
        %2183 = vmatprep.subr.mxu0 0.0
        %2184 = vmatpush2.msra.mxu0 0.0
        %2185 = vmatprep.subr.mxu0 0.0
        %2186 = vmatpush2.msra.mxu0 0.0
        %2187 = vmatprep.subr.mxu0 0.0
        %2188 = vmatpush2.msra.mxu0 0.0
        %2189 = vmatprep.subr.mxu0 0.0
        %2190 = vmatpush2.msra.mxu0 0.0
        %2191 = vmatprep.subr.mxu0 0.0
        %2192 = vmatpush2.msra.mxu0 0.0
        %2193 = vmatprep.subr.mxu0 0.0
        %2194 = vmatpush2.msra.mxu0 0.0
        %2195 = vmatprep.subr.mxu0 0.0
        %2196 = vmatpush2.msra.mxu0 0.0
        %2197 = vmatprep.subr.mxu0 0.0
        %2198 = vmatpush2.msra.mxu0 0.0
        %2199 = vmatprep.subr.mxu0 0.0
        %2200 = vmatpush2.msra.mxu0 0.0
        %2201 = vmatprep.subr.mxu0 0.0
        %2202 = vmatpush2.msra.mxu0 0.0
        %2203 = vmatprep.mubr.f32.mxu0 0.0
        %2204 = vmatmul.mubr.f32.gmra.mxu0 %v2092
        %v2205 = vpop.f32.mrf.mxu0
        %v2206 = vadd.f32 0.0, %v2205
        %v2207 = vpop.f32.mrf.mxu0
        %2208 = vmatprep.mubr.f32.mxu0 0.0
        %2209 = vmatmul.mubr.f32.gmra.mxu0 %v2095
        %v2210 = vpop.f32.mrf.mxu0
        %v2211 = vpop.f32.mrf.mxu0
        %2212 = vmatprep.mubr.f32.mxu0 0.0
        %2213 = vmatmul.mubr.f32.gmra.mxu0 %v2098
        %v2214 = vpop.f32.mrf.mxu0
        %v2215 = vpop.f32.mrf.mxu0
        %2216 = vmatprep.mubr.f32.mxu0 0.0
        %2217 = vmatmul.mubr.f32.gmra.mxu0 %v2101
        %v2218 = vpop.f32.mrf.mxu0
        %v2219 = vpop.f32.mrf.mxu0
        %2220 = vmatprep.mubr.f32.mxu0 0.0
        %2221 = vmatmul.mubr.f32.gmra.mxu0 %v2104
        %v2222 = vpop.f32.mrf.mxu0
        %v2223 = vpop.f32.mrf.mxu0
        %2224 = vmatprep.mubr.f32.mxu0 0.0
        %2225 = vmatmul.mubr.f32.gmra.mxu0 %v2107
        %v2226 = vpop.f32.mrf.mxu0
        %v2227 = vpop.f32.mrf.mxu0
        %2228 = vmatprep.mubr.f32.mxu0 0.0
        %2229 = vmatmul.mubr.f32.gmra.mxu0 %v2110
        %v2230 = vpop.f32.mrf.mxu0
        %v2231 = vpop.f32.mrf.mxu0
        %2232 = vmatprep.mubr.f32.mxu0 0.0
        %2233 = vmatmul.mubr.f32.gmra.mxu0 %v2113
        %v2234 = vpop.f32.mrf.mxu0
        %v2235 = vpop.f32.mrf.mxu0
        %2236 = vmatprep.mubr.f32.mxu0 0.0
        %2237 = vmatmul.mubr.f32.gmra.mxu0 %v2116
        %v2238 = vpop.f32.mrf.mxu0
        %v2239 = vpop.f32.mrf.mxu0
        %2240 = vmatprep.mubr.f32.mxu0 0.0
        %2241 = vmatmul.mubr.f32.gmra.mxu0 %v2119
        %v2242 = vpop.f32.mrf.mxu0
        %v2243 = vpop.f32.mrf.mxu0
        %2244 = vmatprep.mubr.f32.mxu0 0.0
        %2245 = vmatmul.mubr.f32.gmra.mxu0 %v2122
        %v2246 = vpop.f32.mrf.mxu0
        %v2247 = vpop.f32.mrf.mxu0
        %2248 = vmatprep.mubr.f32.mxu0 0.0
        %2249 = vmatmul.mubr.f32.gmra.mxu0 %v2125
        %v2250 = vpop.f32.mrf.mxu0
        %v2251 = vpop.f32.mrf.mxu0
        %2252 = vmatprep.mubr.f32.mxu0 0.0
        %2253 = vmatmul.mubr.f32.gmra.mxu0 %v2128
        %v2254 = vpop.f32.mrf.mxu0
        %v2255 = vpop.f32.mrf.mxu0
        %2256 = vmatprep.mubr.f32.mxu0 0.0
        %2257 = vmatmul.mubr.f32.gmra.mxu0 %v2131
        %v2258 = vpop.f32.mrf.mxu0
        %v2259 = vpop.f32.mrf.mxu0
        %2260 = vmatprep.mubr.f32.mxu0 0.0
        %2261 = vmatmul.mubr.f32.gmra.mxu0 %v2134
        %v2262 = vpop.f32.mrf.mxu0
        %v2263 = vpop.f32.mrf.mxu0
        %2264 = vmatprep.mubr.f32.mxu0 0.0
        %2265 = vmatmul.mubr.f32.gmra.mxu0 %v2137
        %v2266 = vpop.f32.mrf.mxu0
        %v2267 = vpop.f32.mrf.mxu0
        %2268 = vdwg.mxu0
        %v2270 = vsel %vm2090, %v1718, 0
        %v2273 = vsel %vm2090, %v1723, 0
        %v2276 = vsel %vm2090, %v1728, 0
        %v2279 = vsel %vm2090, %v1733, 0
        %v2282 = vsel %vm2090, %v1738, 0
        %v2285 = vsel %vm2090, %v1743, 0
        %v2288 = vsel %vm2090, %v1748, 0
        %v2291 = vsel %vm2090, %v1753, 0
        %v2294 = vsel %vm2090, %v1758, 0
        %v2297 = vsel %vm2090, %v1763, 0
        %v2300 = vsel %vm2090, %v1768, 0
        %v2303 = vsel %vm2090, %v1773, 0
        %v2306 = vsel %vm2090, %v1778, 0
        %v2309 = vsel %vm2090, %v1783, 0
        %v2312 = vsel %vm2090, %v1788, 0
        %v2315 = vsel %vm2090, %v1793, 0
        %2317 = vmatprep.subr.mxu0 0.0
        %2318 = vmatpush1.msra.mxu0 0.0
        %2319 = vmatprep.subr.mxu0 0.0
        %2320 = vmatpush1.msra.mxu0 0.0
        %2321 = vmatprep.subr.mxu0 0.0
        %2322 = vmatpush1.msra.mxu0 0.0
        %2323 = vmatprep.subr.mxu0 0.0
        %2324 = vmatpush1.msra.mxu0 0.0
        %2325 = vmatprep.subr.mxu0 0.0
        %2326 = vmatpush1.msra.mxu0 0.0
        %2327 = vmatprep.subr.mxu0 0.0
        %2328 = vmatpush1.msra.mxu0 0.0
        %2329 = vmatprep.subr.mxu0 0.0
        %2330 = vmatpush1.msra.mxu0 0.0
        %2331 = vmatprep.subr.mxu0 0.0
        %2332 = vmatpush1.msra.mxu0 0.0
        %2333 = vmatprep.subr.mxu0 0.0
        %2334 = vmatpush1.msra.mxu0 0.0
        %2335 = vmatprep.subr.mxu0 0.0
        %2336 = vmatpush1.msra.mxu0 0.0
        %2337 = vmatprep.subr.mxu0 0.0
        %2338 = vmatpush1.msra.mxu0 0.0
        %2339 = vmatprep.subr.mxu0 0.0
        %2340 = vmatpush1.msra.mxu0 0.0
        %2341 = vmatprep.subr.mxu0 0.0
        %2342 = vmatpush1.msra.mxu0 0.0
        %2343 = vmatprep.subr.mxu0 0.0
        %2344 = vmatpush1.msra.mxu0 0.0
        %2345 = vmatprep.subr.mxu0 0.0
        %2346 = vmatpush1.msra.mxu0 %v2087
        %2347 = vmatprep.subr.mxu0 0.0
        %2348 = vmatpush1.msra.mxu0 %v2086
        %2349 = vmatprep.subr.mxu0 0.0
        %2350 = vmatpush2.msra.mxu0 0.0
        %2351 = vmatprep.subr.mxu0 0.0
        %2352 = vmatpush2.msra.mxu0 0.0
        %2353 = vmatprep.subr.mxu0 0.0
        %2354 = vmatpush2.msra.mxu0 0.0
        %2355 = vmatprep.subr.mxu0 0.0
        %2356 = vmatpush2.msra.mxu0 0.0
        %2357 = vmatprep.subr.mxu0 0.0
        %2358 = vmatpush2.msra.mxu0 0.0
        %2359 = vmatprep.subr.mxu0 0.0
        %2360 = vmatpush2.msra.mxu0 0.0
        %2361 = vmatprep.subr.mxu0 0.0
        %2362 = vmatpush2.msra.mxu0 0.0
        %2363 = vmatprep.subr.mxu0 0.0
        %2364 = vmatpush2.msra.mxu0 0.0
        %2365 = vmatprep.subr.mxu0 0.0
        %2366 = vmatpush2.msra.mxu0 0.0
        %2367 = vmatprep.subr.mxu0 0.0
        %2368 = vmatpush2.msra.mxu0 0.0
        %2369 = vmatprep.subr.mxu0 0.0
        %2370 = vmatpush2.msra.mxu0 0.0
        %2371 = vmatprep.subr.mxu0 0.0
        %2372 = vmatpush2.msra.mxu0 0.0
        %2373 = vmatprep.subr.mxu0 0.0
        %2374 = vmatpush2.msra.mxu0 0.0
        %2375 = vmatprep.subr.mxu0 0.0
        %2376 = vmatpush2.msra.mxu0 0.0
        %2377 = vmatprep.subr.mxu0 0.0
        %2378 = vmatpush2.msra.mxu0 0.0
        %2379 = vmatprep.subr.mxu0 0.0
        %2380 = vmatpush2.msra.mxu0 0.0
        %2381 = vmatprep.mubr.f32.mxu0 0.0
        %2382 = vmatmul.mubr.f32.gmra.mxu0 %v2270
        %v2383 = vpop.f32.mrf.mxu0
        %v2384 = vadd.f32 %v2206, %v2383
        %v2385 = vpop.f32.mrf.mxu0
        %2386 = vmatprep.mubr.f32.mxu0 0.0
        %2387 = vmatmul.mubr.f32.gmra.mxu0 %v2273
        %v2388 = vpop.f32.mrf.mxu0
        %v2389 = vpop.f32.mrf.mxu0
        %2390 = vmatprep.mubr.f32.mxu0 0.0
        %2391 = vmatmul.mubr.f32.gmra.mxu0 %v2276
        %v2392 = vpop.f32.mrf.mxu0
        %v2393 = vpop.f32.mrf.mxu0
        %2394 = vmatprep.mubr.f32.mxu0 0.0
        %2395 = vmatmul.mubr.f32.gmra.mxu0 %v2279
        %v2396 = vpop.f32.mrf.mxu0
        %v2397 = vpop.f32.mrf.mxu0
        %2398 = vmatprep.mubr.f32.mxu0 0.0
        %2399 = vmatmul.mubr.f32.gmra.mxu0 %v2282
        %v2400 = vpop.f32.mrf.mxu0
        %v2401 = vpop.f32.mrf.mxu0
        %2402 = vmatprep.mubr.f32.mxu0 0.0
        %2403 = vmatmul.mubr.f32.gmra.mxu0 %v2285
        %v2404 = vpop.f32.mrf.mxu0
        %v2405 = vpop.f32.mrf.mxu0
        %2406 = vmatprep.mubr.f32.mxu0 0.0
        %2407 = vmatmul.mubr.f32.gmra.mxu0 %v2288
        %v2408 = vpop.f32.mrf.mxu0
        %v2409 = vpop.f32.mrf.mxu0
        %2410 = vmatprep.mubr.f32.mxu0 0.0
        %2411 = vmatmul.mubr.f32.gmra.mxu0 %v2291
        %v2412 = vpop.f32.mrf.mxu0
        %v2413 = vpop.f32.mrf.mxu0
        %2414 = vmatprep.mubr.f32.mxu0 0.0
        %2415 = vmatmul.mubr.f32.gmra.mxu0 %v2294
        %v2416 = vpop.f32.mrf.mxu0
        %v2417 = vpop.f32.mrf.mxu0
        %2418 = vmatprep.mubr.f32.mxu0 0.0
        %2419 = vmatmul.mubr.f32.gmra.mxu0 %v2297
        %v2420 = vpop.f32.mrf.mxu0
        %v2421 = vpop.f32.mrf.mxu0
        %2422 = vmatprep.mubr.f32.mxu0 0.0
        %2423 = vmatmul.mubr.f32.gmra.mxu0 %v2300
        %v2424 = vpop.f32.mrf.mxu0
        %v2425 = vpop.f32.mrf.mxu0
        %2426 = vmatprep.mubr.f32.mxu0 0.0
        %2427 = vmatmul.mubr.f32.gmra.mxu0 %v2303
        %v2428 = vpop.f32.mrf.mxu0
        %v2429 = vpop.f32.mrf.mxu0
        %2430 = vmatprep.mubr.f32.mxu0 0.0
        %2431 = vmatmul.mubr.f32.gmra.mxu0 %v2306
        %v2432 = vpop.f32.mrf.mxu0
        %v2433 = vpop.f32.mrf.mxu0
        %2434 = vmatprep.mubr.f32.mxu0 0.0
        %2435 = vmatmul.mubr.f32.gmra.mxu0 %v2309
        %v2436 = vpop.f32.mrf.mxu0
        %v2437 = vpop.f32.mrf.mxu0
        %2438 = vmatprep.mubr.f32.mxu0 0.0
        %2439 = vmatmul.mubr.f32.gmra.mxu0 %v2312
        %v2440 = vpop.f32.mrf.mxu0
        %v2441 = vpop.f32.mrf.mxu0
        %2442 = vmatprep.mubr.f32.mxu0 0.0
        %2443 = vmatmul.mubr.f32.gmra.mxu0 %v2315
        %v2444 = vpop.f32.mrf.mxu0
        %v2445 = vpop.f32.mrf.mxu0
        %2446 = vdwg.mxu0
        %v2447 = vld [vmem:[%s11] sm:$0xff]
        %2449 = vset.pattern.permute.xlu0 0
        %2450 = vperm.xlu0 %2449, %v2447
        %v2451 = vpop.permute.xlu0 %2450
        %v2453 = vadd.f32 %v2384, %v2451
        %vm2454 = vcmask 519168
        %2455 = vst.msk [vmem:[%s460] sm:$0xf] %vm2454, %v2453
        %s2456 = sand.u32 %s335, 1
        %s2457 = scalar_lea.sflag [#allocation5], %s2456
        %s2458 = sand.u32 %s335, 1
        %s2459 = smul.addr %s2458, 4
        %s2460 = scalar_lea.vmem [#allocation4], %s2459
        // Predicated region
        $region77: #{decoder2_forward.1} parent=75 // pred_check
          %p2461 = pneg %p345
        $region78: #{decoder2_forward.1} parent=75 // pred_check_branch
          %2463 = sbr.rel (%p2461) target = $region80
        $region79: #{decoder2_forward.1} parent=75 // pred_region
          %s2465 = ssub.s32 64, 64
          %2466 = vsyncadd %s2457, %s2465
          %s2467 = smul.addr %s28, 64
          %s2468 = scalar_lea.hbm %s14, %s2467
          %s2470 = sshll.u32 %s2460, 4
          %s2471 = int_to_ptr.vmem [resolvable:$true] %s2470
          %2473 = dma.vmem_to_hbm [thread:$0]  %s2471, 64, %s2468, %s2457
        $region80: #{decoder2_forward.1} parent=75 // pred_fallthru
          _
      $region76: #{decoder2_forward.1} parent=5 // pred_fallthru
        _
      %p2474 = scmp.le.s32.totalorder 2, %s23
      // Predicated region
      $region81: #{decoder2_forward.1} parent=5 // pred_check
        %p2475 = pneg %p2474
      $region82: #{decoder2_forward.1} parent=5 // pred_check_branch
        %2477 = sbr.rel (%p2475) target = $region84
      $region83: #{decoder2_forward.1} parent=5 // pred_region
        %s2478 = ssub.s32 %s23, 2
        // Predicated region
        $region85: #{decoder2_forward.1} parent=83 // pred_check
          %p2479 = pneg %p351
        $region86: #{decoder2_forward.1} parent=83 // pred_check_branch
          %2481 = sbr.rel (%p2479) target = $region88
        $region87: #{decoder2_forward.1} parent=83 // pred_region
          %s2482 = sand.u32 %s336, 1
          %s2483 = scalar_lea.sflag [#allocation5], %s2482
          %s2484 = sand.u32 %s336, 1
          %s2485 = smul.addr %s2484, 4
          %s2486 = scalar_lea.vmem [#allocation4], %s2485
          %2487 = dma.done %s2483, 64
        $region88: #{decoder2_forward.1} parent=83 // pred_fallthru
          _
      $region84: #{decoder2_forward.1} parent=5 // pred_fallthru
        _
    $region6: #{decoder2_forward.1} parent=1 // loop_footer
      %s27 = sadd.s32 1, %s23
    $region7: #{decoder2_forward.1} parent=1 // loop_footer_branch
      %22 = sbr.rel target = $region3
    $region8: #{decoder2_forward.1} parent=1 // loop_exit
      _
    %2488 = vsyncpa [#allocation5], 1
    %s2489 = scalar_lea.sflag [#allocation5], 1
    %2490 = vsyncpa %s2489, 1

</llo_original>
